<compile_context>
chip_gen: v5e
topology: v5e:2x2
jax: 0.10.0
libtpu: 0.0.40
codegen_flags: <defaults>
</compile_context>

<pallas_src>
import functools
import math

import jax
import jax.numpy as jnp
from jax.experimental import pallas as pl
from jax.experimental.pallas import tpu as pltpu


def _round_up(x, m):
    return (x + m - 1) // m * m


def _cdiv(a, b):
    return (a + b - 1) // b


def conv_stats_kernel(x_ref, w_ref, y_ref, stats_ref, *,
                      KH, KW, stride, tile_oh, Wo, Ho, n_oh_tiles):
    """Pass 1: conv for one (image, output-row tile) + per-tile centered BN stats.

    x_ref:     (1, s*s, Hs, Ws, Cin)   bf16 stride-phase-decomposed padded image
    w_ref:     (KH*KW, Cin, Cout_pad)  bf16 conv weights (tap-major)
    y_ref:     (1, tile_oh*Wo, Cpad)   bf16 conv output tile
    stats_ref: (1, 1, 2, Cpad)         f32: row0 = tile mean, row1 = tile M2
    """
    j = pl.program_id(1)
    oh0 = j * tile_oh
    cin = x_ref.shape[-1]
    cpad = w_ref.shape[-1]
    tile_rows = tile_oh * Wo

    # Accumulate all KH*KW taps into one f32 accumulator (taps folded in-kernel;
    # no im2col ever touches HBM).
    acc = jnp.zeros((tile_rows, cpad), jnp.float32)
    for kh in range(KH):
        for kw in range(KW):
            p = (kh % stride) * stride + (kw % stride)       # static phase index
            r0 = oh0 + kh // stride                          # dynamic row start
            c0 = kw // stride                                # static col start
            xt = x_ref[0, p, pl.ds(r0, tile_oh), pl.ds(c0, Wo), :]
            xt = xt.reshape(tile_rows, cin)
            acc = acc + jnp.dot(xt, w_ref[kh * KW + kw],
                                preferred_element_type=jnp.float32)

    # bf16 intermediate (review item): stats come from the f32 acc below.
    y_ref[0] = acc.astype(y_ref.dtype)

    def emit_stats(nvalid):
        if nvalid == tile_rows:
            vals = acc
            mean_t = jnp.sum(vals, axis=0, keepdims=True) * (1.0 / nvalid)
            c = vals - mean_t
        else:
            # Only the last row tile has zero-padded output rows.
            rid = jax.lax.broadcasted_iota(jnp.int32, (tile_rows, 1), 0)
            valid = rid < nvalid
            vals = jnp.where(valid, acc, 0.0)
            mean_t = jnp.sum(vals, axis=0, keepdims=True) * (1.0 / nvalid)
            c = jnp.where(valid, acc - mean_t, 0.0)
        m2_t = jnp.sum(c * c, axis=0, keepdims=True)
        stats_ref[0, 0] = jnp.concatenate([mean_t, m2_t], axis=0)

    last_valid = Ho * Wo - (n_oh_tiles - 1) * tile_rows
    if last_valid == tile_rows:           # no padded output rows anywhere
        emit_stats(tile_rows)
    elif n_oh_tiles == 1:
        emit_stats(last_valid)
    else:
        @pl.when(j == n_oh_tiles - 1)
        def _():
            emit_stats(last_valid)

        @pl.when(j < n_oh_tiles - 1)
        def _():
            emit_stats(tile_rows)


def bn_relu_transpose_kernel(y_ref, scale_ref, shift_ref, o_ref, *, relu):
    """Pass 2: folded BN (+ReLU), stored transposed so NCHW needs no XLA transpose.

    y_ref: (1, HWp, Cpad) bf16 ; scale/shift: (1, Cpad) f32 ; o_ref: (1, Cpad, HWp) f32
    """
    y = y_ref[0].astype(jnp.float32) * scale_ref[...] + shift_ref[...]
    if relu:
        y = jnp.maximum(y, 0.0)
    o_ref[0] = jnp.transpose(y).astype(o_ref.dtype)


def resnet_conv(x_nchw, w_oihw, b, gamma, beta, *, stride=1, padding=1,
                eps=1e-5, no_relu=False, compute_dtype=jnp.bfloat16,
                tile_oh=None):
    """ResNetConv forward. Input NCHW, weight OIHW, output NCHW (PyTorch conventions)."""
    del b  # Conv2d bias cancels exactly under training-mode BatchNorm (mean removal).
    N, Cin, H, W = x_nchw.shape
    Cout, Cin_w, KH, KW = w_oihw.shape
    assert Cin_w == Cin
    s = int(stride)
    Ho = (H + 2 * padding - KH) // s + 1
    Wo = (W + 2 * padding - KW) // s + 1
    Cpad = _round_up(Cout, 128)

    # --- output-row tiling: tile_oh output rows x full Wo per grid step ----------
    # Keep tile_oh*Wo a multiple of 16 (bf16 sublane packing / block divisibility).
    granule = 16 // math.gcd(Wo, 16)
    if tile_oh is None:
        tile_oh = max(1, 4096 // max(Wo, 1))
    tile_oh = _round_up(max(1, min(int(tile_oh), Ho)), granule)
    n_oh_tiles = _cdiv(Ho, tile_oh)
    Ho_pad = n_oh_tiles * tile_oh
    tile_rows = tile_oh * Wo
    HWp = Ho_pad * Wo

    # --- glue: NCHW -> NHWC bf16, zero-pad, stride-phase decomposition -----------
    # One cheap XLA pass over the input; NO im2col materialization in HBM.
    x = jnp.transpose(x_nchw, (0, 2, 3, 1)).astype(compute_dtype)       # (N,H,W,Cin)
    x = jnp.pad(x, ((0, 0), (padding, padding), (padding, padding), (0, 0)))
    Hs = _cdiv((Ho_pad - 1) * s + KH, s)
    Ws = _cdiv((Wo - 1) * s + KW, s)
    x = x[:, :Hs * s, :Ws * s, :]
    x = jnp.pad(x, ((0, 0), (0, Hs * s - x.shape[1]),
                    (0, Ws * s - x.shape[2]), (0, 0)))
    # x[n,h,w,c] -> x_dec[n, (h%s)*s + (w%s), h//s, w//s, c]
    x_dec = x.reshape(N, Hs, s, Ws, s, Cin).transpose(0, 2, 4, 1, 3, 5)
    x_dec = x_dec.reshape(N, s * s, Hs, Ws, Cin)

    # Conv weights: OIHW -> (KH*KW, Cin, Cout_pad) bf16.
    w3 = jnp.transpose(w_oihw, (2, 3, 1, 0)).reshape(KH * KW, Cin, Cout)
    w3 = jnp.pad(w3.astype(compute_dtype), ((0, 0), (0, 0), (0, Cpad - Cout)))

    # Per-tile working set is tiny; 32 MiB is safe on all generations (can be
    # raised on v5e/v6e's 128 MiB VMEM for larger row tiles on big layers).
    vmem_limit = 32 * 1024 * 1024

    flops1 = 2 * N * HWp * KH * KW * Cin * Cpad
    bytes1 = (x_dec.size * x_dec.dtype.itemsize
              + w3.size * w3.dtype.itemsize
              + N * HWp * Cpad * 2
              + N * n_oh_tiles * 2 * Cpad * 4)

    # --- pass 1: conv (taps folded in-kernel) + per-tile centered stats ----------
    conv_out, stats = pl.pallas_call(
        functools.partial(conv_stats_kernel, KH=KH, KW=KW, stride=s,
                          tile_oh=tile_oh, Wo=Wo, Ho=Ho, n_oh_tiles=n_oh_tiles),
        grid=(N, n_oh_tiles),
        in_specs=[
            # Whole decomposed image per n; revisited (no re-DMA) across row tiles.
            pl.BlockSpec((1, s * s, Hs, Ws, Cin), lambda n, j: (n, 0, 0, 0, 0)),
            # Weights resident across the whole grid.
            pl.BlockSpec((KH * KW, Cin, Cpad), lambda n, j: (0, 0, 0)),
        ],
        out_specs=[
            pl.BlockSpec((1, tile_rows, Cpad), lambda n, j: (n, j, 0)),
            pl.BlockSpec((1, 1, 2, Cpad), lambda n, j: (n, j, 0, 0)),
        ],
        out_shape=[
            jax.ShapeDtypeStruct((N, HWp, Cpad), compute_dtype),      # bf16 intermediate
            jax.ShapeDtypeStruct((N, n_oh_tiles, 2, Cpad), jnp.float32),
        ],
        compiler_params=pltpu.CompilerParams(
            dimension_semantics=("parallel", "parallel"),
            vmem_limit_bytes=vmem_limit),
        cost_estimate=pl.CostEstimate(flops=flops1, transcendentals=0,
                                      bytes_accessed=bytes1),
    )(x_dec, w3)

    # --- tiny per-channel combine (glue): Chan merge of (mean, M2) per tile ------
    last_valid = Ho * Wo - (n_oh_tiles - 1) * tile_rows
    counts = jnp.full((n_oh_tiles,), float(tile_rows), jnp.float32)
    counts = counts.at[-1].set(float(last_valid))
    cnt = counts[None, :, None]                                # (1, T, 1)
    mean_t = stats[:, :, 0, :]                                 # (N, T, Cpad)
    m2_t = stats[:, :, 1, :]
    total = float(N * Ho * Wo)
    mean = jnp.sum(mean_t * cnt, axis=(0, 1)) / total
    m2 = jnp.sum(m2_t, axis=(0, 1)) + jnp.sum(cnt * (mean_t - mean) ** 2, axis=(0, 1))
    var = m2 / total                                           # biased (training BN)

    gamma_p = jnp.pad(gamma.astype(jnp.float32), (0, Cpad - Cout))
    beta_p = jnp.pad(beta.astype(jnp.float32), (0, Cpad - Cout))
    scale = gamma_p * jax.lax.rsqrt(var + eps)
    shift = beta_p - mean * scale

    # --- pass 2: normalize + ReLU, stored transposed (channel-major) -------------
    out = pl.pallas_call(
        functools.partial(bn_relu_transpose_kernel, relu=not no_relu),
        grid=(N,),
        in_specs=[
            pl.BlockSpec((1, HWp, Cpad), lambda n: (n, 0, 0)),
            pl.BlockSpec((1, Cpad), lambda n: (0, 0)),
            pl.BlockSpec((1, Cpad), lambda n: (0, 0)),
        ],
        out_specs=pl.BlockSpec((1, Cpad, HWp), lambda n: (n, 0, 0)),
        out_shape=jax.ShapeDtypeStruct((N, Cpad, HWp), jnp.float32),
        compiler_params=pltpu.CompilerParams(
            dimension_semantics=("parallel",),
            vmem_limit_bytes=vmem_limit),
        cost_estimate=pl.CostEstimate(
            flops=3 * N * HWp * Cpad, transcendentals=0,
            bytes_accessed=N * HWp * Cpad * (2 + 4) + 2 * Cpad * 4),
    )(conv_out, scale.reshape(1, Cpad), shift.reshape(1, Cpad))

    # NCHW comes straight off the transposed store; only padding is sliced away
    # (padded output rows were masked out of the stats, then dropped here).
    return out[:, :Cout, :Ho * Wo].reshape(N, Cout, Ho, Wo)


def reference(x, w, b, gamma, beta, *, stride, padding, eps=1e-5, no_relu=False,
              compute_dtype=jnp.bfloat16):
    """Plain-JAX reference: Conv2d + BatchNorm2d(train) + ReLU, same bf16-cast inputs."""
    xq = x.astype(compute_dtype).astype(jnp.float32)
    wq = w.astype(compute_dtype).astype(jnp.float32)
    y = jax.lax.conv_general_dilated(
        xq, wq, window_strides=(stride, stride),
        padding=((padding, padding), (padding, padding)),
        dimension_numbers=("NCHW", "OIHW", "NCHW"))
    y = y + b[None, :, None, None]
    mean = jnp.mean(y, axis=(0, 2, 3), keepdims=True)
    var = jnp.mean((y - mean) ** 2, axis=(0, 2, 3), keepdims=True)
    y = (y - mean) * jax.lax.rsqrt(var + eps) * gamma[None, :, None, None] \
        + beta[None, :, None, None]
    if not no_relu:
        y = jnp.maximum(y, 0.0)
    return y


def _run_case(key, N, Cin, H, W, Cout, KH, KW, stride, padding, no_relu, tile_oh):
    k1, k2, k3, k4, k5 = jax.random.split(key, 5)
    x = jax.random.normal(k1, (N, Cin, H, W), jnp.float32)
    w = jax.random.normal(k2, (Cout, Cin, KH, KW), jnp.float32) * 0.1
    b = jax.random.normal(k3, (Cout,), jnp.float32) * 0.1
    gamma = 1.0 + 0.1 * jax.random.normal(k4, (Cout,), jnp.float32)
    beta = 0.1 * jax.random.normal(k5, (Cout,), jnp.float32)

    out = resnet_conv(x, w, b, gamma, beta, stride=stride, padding=padding,
                      no_relu=no_relu, tile_oh=tile_oh)
    out = jax.block_until_ready(out)
    ref = reference(x, w, b, gamma, beta, stride=stride, padding=padding,
                    no_relu=no_relu)
    assert out.shape == ref.shape, (out.shape, ref.shape)
    err = float(jnp.max(jnp.abs(out - ref)))
    # bf16 conv intermediate -> ~2^-9 relative rounding on the normalized values.
    assert jnp.allclose(out, ref, atol=5e-3, rtol=5e-3), err
    return err


if __name__ == "__main__":
    key = jax.random.PRNGKey(0)
    k1, k2, k3, k4 = jax.random.split(key, 4)

    # ResNetConv(in_ch=4, out_ch=8, kernel_size=3, stride=1, padding=1):
    # 2 row tiles per image -> tiled grid + stats combine.
    _run_case(k1, N=2, Cin=4, H=16, W=16, Cout=8, KH=3, KW=3,
              stride=1, padding=1, no_relu=False, tile_oh=8)

    # Odd spatial size (Wo=15): single padded tile -> masked-stats path.
    _run_case(k2, N=2, Cin=4, H=15, W=15, Cout=8, KH=3, KW=3,
              stride=1, padding=1, no_relu=False, tile_oh=8)

    # Multiple tiles with a partially-valid last tile -> pl.when-guarded mask path.
    _run_case(k3, N=2, Cin=4, H=20, W=16, Cout=8, KH=3, KW=3,
              stride=1, padding=1, no_relu=False, tile_oh=8)

    # Strided conv, no ReLU (ResNet downsample-style) -> stride-phase path.
    _run_case(k4, N=2, Cin=4, H=16, W=16, Cout=8, KH=3, KW=3,
              stride=2, padding=1, no_relu=True, tile_oh=4)

    print("KERNEL_OK")
</pallas_src>

<mosaic_0001>
module attributes {stable_mosaic.version = 11 : i64} {
  func.func @conv_stats_kernel(%arg0: i32, %arg1: i32, %arg2: memref<1x1x18x18x4xbf16, #tpu.memory_space<vmem>>, %arg3: memref<9x4x128xbf16, #tpu.memory_space<vmem>>, %arg4: memref<1x128x128xbf16, #tpu.memory_space<vmem>>, %arg5: memref<1x1x2x128xf32, #tpu.memory_space<vmem>>) attributes {dimension_semantics = [#tpu.dimension_semantics<parallel>, #tpu.dimension_semantics<parallel>], iteration_bounds = array<i64: 2, 2>, scalar_prefetch = 0 : i64, scratch_operands = 0 : i64, tpu.core_type = #tpu.core_type<tc>, window_params = [{transform_indices = @transform_0, window_bounds = array<i64: 1, 1, 18, 18, 4>}, {pipeline_mode = #tpu.pipeline_mode<synchronous>, transform_indices = @transform_1, window_bounds = array<i64: 9, 4, 128>}, {transform_indices = @transform_2, window_bounds = array<i64: 1, 128, 128>}, {transform_indices = @transform_3, window_bounds = array<i64: 1, 1, 2, 128>}]} {
    %c8_i32 = arith.constant 8 : i32
    %0 = arith.muli %arg1, %c8_i32 : i32
    %cst = arith.constant 0.000000e+00 : f32
    %1 = vector.broadcast %cst : f32 to vector<128x128xf32>
    %c0_i32 = arith.constant 0 : i32
    %2 = arith.addi %0, %c0_i32 : i32
    %c0 = arith.constant 0 : index
    %c0_0 = arith.constant 0 : index
    %3 = arith.index_cast %2 : i32 to index
    %c0_1 = arith.constant 0 : index
    %c0_2 = arith.constant 0 : index
    %4 = vector.load %arg2[%c0, %c0_0, %3, %c0_1, %c0_2] : memref<1x1x18x18x4xbf16, #tpu.memory_space<vmem>>, vector<1x1x8x16x4xbf16>
    %5 = vector.shape_cast %4 : vector<1x1x8x16x4xbf16> to vector<8x16x4xbf16>
    %6 = vector.shape_cast %5 : vector<8x16x4xbf16> to vector<128x4xbf16>
    %c0_3 = arith.constant 0 : index
    %c0_4 = arith.constant 0 : index
    %c0_5 = arith.constant 0 : index
    %7 = vector.load %arg3[%c0_3, %c0_4, %c0_5] : memref<9x4x128xbf16, #tpu.memory_space<vmem>>, vector<1x4x128xbf16>
    %8 = vector.shape_cast %7 : vector<1x4x128xbf16> to vector<4x128xbf16>
    %cst_6 = arith.constant dense<0.000000e+00> : vector<128x128xf32>
    %9 = tpu.matmul %6, %8, %cst_6 {dimension_numbers = #tpu.dot_dimension_numbers<[1], [0], [0], [1], [0, 0, 1, 1], [], []>} : vector<128x4xbf16>, vector<4x128xbf16>, vector<128x128xf32> -> vector<128x128xf32>
    %10 = arith.addf %1, %9 : vector<128x128xf32>
    %c0_i32_7 = arith.constant 0 : i32
    %11 = arith.addi %0, %c0_i32_7 : i32
    %c0_8 = arith.constant 0 : index
    %c0_9 = arith.constant 0 : index
    %12 = arith.index_cast %11 : i32 to index
    %c1 = arith.constant 1 : index
    %c0_10 = arith.constant 0 : index
    %13 = vector.load %arg2[%c0_8, %c0_9, %12, %c1, %c0_10] : memref<1x1x18x18x4xbf16, #tpu.memory_space<vmem>>, vector<1x1x8x16x4xbf16>
    %14 = vector.shape_cast %13 : vector<1x1x8x16x4xbf16> to vector<8x16x4xbf16>
    %15 = vector.shape_cast %14 : vector<8x16x4xbf16> to vector<128x4xbf16>
    %c1_11 = arith.constant 1 : index
    %c0_12 = arith.constant 0 : index
    %c0_13 = arith.constant 0 : index
    %16 = vector.load %arg3[%c1_11, %c0_12, %c0_13] : memref<9x4x128xbf16, #tpu.memory_space<vmem>>, vector<1x4x128xbf16>
    %17 = vector.shape_cast %16 : vector<1x4x128xbf16> to vector<4x128xbf16>
    %cst_14 = arith.constant dense<0.000000e+00> : vector<128x128xf32>
    %18 = tpu.matmul %15, %17, %cst_14 {dimension_numbers = #tpu.dot_dimension_numbers<[1], [0], [0], [1], [0, 0, 1, 1], [], []>} : vector<128x4xbf16>, vector<4x128xbf16>, vector<128x128xf32> -> vector<128x128xf32>
    %19 = arith.addf %10, %18 : vector<128x128xf32>
    %c0_i32_15 = arith.constant 0 : i32
    %20 = arith.addi %0, %c0_i32_15 : i32
    %c0_16 = arith.constant 0 : index
    %c0_17 = arith.constant 0 : index
    %21 = arith.index_cast %20 : i32 to index
    %c2 = arith.constant 2 : index
    %c0_18 = arith.constant 0 : index
    %22 = vector.load %arg2[%c0_16, %c0_17, %21, %c2, %c0_18] : memref<1x1x18x18x4xbf16, #tpu.memory_space<vmem>>, vector<1x1x8x16x4xbf16>
    %23 = vector.shape_cast %22 : vector<1x1x8x16x4xbf16> to vector<8x16x4xbf16>
    %24 = vector.shape_cast %23 : vector<8x16x4xbf16> to vector<128x4xbf16>
    %c2_19 = arith.constant 2 : index
    %c0_20 = arith.constant 0 : index
    %c0_21 = arith.constant 0 : index
    %25 = vector.load %arg3[%c2_19, %c0_20, %c0_21] : memref<9x4x128xbf16, #tpu.memory_space<vmem>>, vector<1x4x128xbf16>
    %26 = vector.shape_cast %25 : vector<1x4x128xbf16> to vector<4x128xbf16>
    %cst_22 = arith.constant dense<0.000000e+00> : vector<128x128xf32>
    %27 = tpu.matmul %24, %26, %cst_22 {dimension_numbers = #tpu.dot_dimension_numbers<[1], [0], [0], [1], [0, 0, 1, 1], [], []>} : vector<128x4xbf16>, vector<4x128xbf16>, vector<128x128xf32> -> vector<128x128xf32>
    %28 = arith.addf %19, %27 : vector<128x128xf32>
    %c1_i32 = arith.constant 1 : i32
    %29 = arith.addi %0, %c1_i32 : i32
    %c0_23 = arith.constant 0 : index
    %c0_24 = arith.constant 0 : index
    %30 = arith.index_cast %29 : i32 to index
    %c0_25 = arith.constant 0 : index
    %c0_26 = arith.constant 0 : index
    %31 = vector.load %arg2[%c0_23, %c0_24, %30, %c0_25, %c0_26] : memref<1x1x18x18x4xbf16, #tpu.memory_space<vmem>>, vector<1x1x8x16x4xbf16>
    %32 = vector.shape_cast %31 : vector<1x1x8x16x4xbf16> to vector<8x16x4xbf16>
    %33 = vector.shape_cast %32 : vector<8x16x4xbf16> to vector<128x4xbf16>
    %c3 = arith.constant 3 : index
    %c0_27 = arith.constant 0 : index
    %c0_28 = arith.constant 0 : index
    %34 = vector.load %arg3[%c3, %c0_27, %c0_28] : memref<9x4x128xbf16, #tpu.memory_space<vmem>>, vector<1x4x128xbf16>
    %35 = vector.shape_cast %34 : vector<1x4x128xbf16> to vector<4x128xbf16>
    %cst_29 = arith.constant dense<0.000000e+00> : vector<128x128xf32>
    %36 = tpu.matmul %33, %35, %cst_29 {dimension_numbers = #tpu.dot_dimension_numbers<[1], [0], [0], [1], [0, 0, 1, 1], [], []>} : vector<128x4xbf16>, vector<4x128xbf16>, vector<128x128xf32> -> vector<128x128xf32>
    %37 = arith.addf %28, %36 : vector<128x128xf32>
    %c1_i32_30 = arith.constant 1 : i32
    %38 = arith.addi %0, %c1_i32_30 : i32
    %c0_31 = arith.constant 0 : index
    %c0_32 = arith.constant 0 : index
    %39 = arith.index_cast %38 : i32 to index
    %c1_33 = arith.constant 1 : index
    %c0_34 = arith.constant 0 : index
    %40 = vector.load %arg2[%c0_31, %c0_32, %39, %c1_33, %c0_34] : memref<1x1x18x18x4xbf16, #tpu.memory_space<vmem>>, vector<1x1x8x16x4xbf16>
    %41 = vector.shape_cast %40 : vector<1x1x8x16x4xbf16> to vector<8x16x4xbf16>
    %42 = vector.shape_cast %41 : vector<8x16x4xbf16> to vector<128x4xbf16>
    %c4 = arith.constant 4 : index
    %c0_35 = arith.constant 0 : index
    %c0_36 = arith.constant 0 : index
    %43 = vector.load %arg3[%c4, %c0_35, %c0_36] : memref<9x4x128xbf16, #tpu.memory_space<vmem>>, vector<1x4x128xbf16>
    %44 = vector.shape_cast %43 : vector<1x4x128xbf16> to vector<4x128xbf16>
    %cst_37 = arith.constant dense<0.000000e+00> : vector<128x128xf32>
    %45 = tpu.matmul %42, %44, %cst_37 {dimension_numbers = #tpu.dot_dimension_numbers<[1], [0], [0], [1], [0, 0, 1, 1], [], []>} : vector<128x4xbf16>, vector<4x128xbf16>, vector<128x128xf32> -> vector<128x128xf32>
    %46 = arith.addf %37, %45 : vector<128x128xf32>
    %c1_i32_38 = arith.constant 1 : i32
    %47 = arith.addi %0, %c1_i32_38 : i32
    %c0_39 = arith.constant 0 : index
    %c0_40 = arith.constant 0 : index
    %48 = arith.index_cast %47 : i32 to index
    %c2_41 = arith.constant 2 : index
    %c0_42 = arith.constant 0 : index
    %49 = vector.load %arg2[%c0_39, %c0_40, %48, %c2_41, %c0_42] : memref<1x1x18x18x4xbf16, #tpu.memory_space<vmem>>, vector<1x1x8x16x4xbf16>
    %50 = vector.shape_cast %49 : vector<1x1x8x16x4xbf16> to vector<8x16x4xbf16>
    %51 = vector.shape_cast %50 : vector<8x16x4xbf16> to vector<128x4xbf16>
    %c5 = arith.constant 5 : index
    %c0_43 = arith.constant 0 : index
    %c0_44 = arith.constant 0 : index
    %52 = vector.load %arg3[%c5, %c0_43, %c0_44] : memref<9x4x128xbf16, #tpu.memory_space<vmem>>, vector<1x4x128xbf16>
    %53 = vector.shape_cast %52 : vector<1x4x128xbf16> to vector<4x128xbf16>
    %cst_45 = arith.constant dense<0.000000e+00> : vector<128x128xf32>
    %54 = tpu.matmul %51, %53, %cst_45 {dimension_numbers = #tpu.dot_dimension_numbers<[1], [0], [0], [1], [0, 0, 1, 1], [], []>} : vector<128x4xbf16>, vector<4x128xbf16>, vector<128x128xf32> -> vector<128x128xf32>
    %55 = arith.addf %46, %54 : vector<128x128xf32>
    %c2_i32 = arith.constant 2 : i32
    %56 = arith.addi %0, %c2_i32 : i32
    %c0_46 = arith.constant 0 : index
    %c0_47 = arith.constant 0 : index
    %57 = arith.index_cast %56 : i32 to index
    %c0_48 = arith.constant 0 : index
    %c0_49 = arith.constant 0 : index
    %58 = vector.load %arg2[%c0_46, %c0_47, %57, %c0_48, %c0_49] : memref<1x1x18x18x4xbf16, #tpu.memory_space<vmem>>, vector<1x1x8x16x4xbf16>
    %59 = vector.shape_cast %58 : vector<1x1x8x16x4xbf16> to vector<8x16x4xbf16>
    %60 = vector.shape_cast %59 : vector<8x16x4xbf16> to vector<128x4xbf16>
    %c6 = arith.constant 6 : index
    %c0_50 = arith.constant 0 : index
    %c0_51 = arith.constant 0 : index
    %61 = vector.load %arg3[%c6, %c0_50, %c0_51] : memref<9x4x128xbf16, #tpu.memory_space<vmem>>, vector<1x4x128xbf16>
    %62 = vector.shape_cast %61 : vector<1x4x128xbf16> to vector<4x128xbf16>
    %cst_52 = arith.constant dense<0.000000e+00> : vector<128x128xf32>
    %63 = tpu.matmul %60, %62, %cst_52 {dimension_numbers = #tpu.dot_dimension_numbers<[1], [0], [0], [1], [0, 0, 1, 1], [], []>} : vector<128x4xbf16>, vector<4x128xbf16>, vector<128x128xf32> -> vector<128x128xf32>
    %64 = arith.addf %55, %63 : vector<128x128xf32>
    %c2_i32_53 = arith.constant 2 : i32
    %65 = arith.addi %0, %c2_i32_53 : i32
    %c0_54 = arith.constant 0 : index
    %c0_55 = arith.constant 0 : index
    %66 = arith.index_cast %65 : i32 to index
    %c1_56 = arith.constant 1 : index
    %c0_57 = arith.constant 0 : index
    %67 = vector.load %arg2[%c0_54, %c0_55, %66, %c1_56, %c0_57] : memref<1x1x18x18x4xbf16, #tpu.memory_space<vmem>>, vector<1x1x8x16x4xbf16>
    %68 = vector.shape_cast %67 : vector<1x1x8x16x4xbf16> to vector<8x16x4xbf16>
    %69 = vector.shape_cast %68 : vector<8x16x4xbf16> to vector<128x4xbf16>
    %c7 = arith.constant 7 : index
    %c0_58 = arith.constant 0 : index
    %c0_59 = arith.constant 0 : index
    %70 = vector.load %arg3[%c7, %c0_58, %c0_59] : memref<9x4x128xbf16, #tpu.memory_space<vmem>>, vector<1x4x128xbf16>
    %71 = vector.shape_cast %70 : vector<1x4x128xbf16> to vector<4x128xbf16>
    %cst_60 = arith.constant dense<0.000000e+00> : vector<128x128xf32>
    %72 = tpu.matmul %69, %71, %cst_60 {dimension_numbers = #tpu.dot_dimension_numbers<[1], [0], [0], [1], [0, 0, 1, 1], [], []>} : vector<128x4xbf16>, vector<4x128xbf16>, vector<128x128xf32> -> vector<128x128xf32>
    %73 = arith.addf %64, %72 : vector<128x128xf32>
    %c2_i32_61 = arith.constant 2 : i32
    %74 = arith.addi %0, %c2_i32_61 : i32
    %c0_62 = arith.constant 0 : index
    %c0_63 = arith.constant 0 : index
    %75 = arith.index_cast %74 : i32 to index
    %c2_64 = arith.constant 2 : index
    %c0_65 = arith.constant 0 : index
    %76 = vector.load %arg2[%c0_62, %c0_63, %75, %c2_64, %c0_65] : memref<1x1x18x18x4xbf16, #tpu.memory_space<vmem>>, vector<1x1x8x16x4xbf16>
    %77 = vector.shape_cast %76 : vector<1x1x8x16x4xbf16> to vector<8x16x4xbf16>
    %78 = vector.shape_cast %77 : vector<8x16x4xbf16> to vector<128x4xbf16>
    %c8 = arith.constant 8 : index
    %c0_66 = arith.constant 0 : index
    %c0_67 = arith.constant 0 : index
    %79 = vector.load %arg3[%c8, %c0_66, %c0_67] : memref<9x4x128xbf16, #tpu.memory_space<vmem>>, vector<1x4x128xbf16>
    %80 = vector.shape_cast %79 : vector<1x4x128xbf16> to vector<4x128xbf16>
    %cst_68 = arith.constant dense<0.000000e+00> : vector<128x128xf32>
    %81 = tpu.matmul %78, %80, %cst_68 {dimension_numbers = #tpu.dot_dimension_numbers<[1], [0], [0], [1], [0, 0, 1, 1], [], []>} : vector<128x4xbf16>, vector<4x128xbf16>, vector<128x128xf32> -> vector<128x128xf32>
    %82 = arith.addf %73, %81 : vector<128x128xf32>
    %83 = arith.truncf %82 : vector<128x128xf32> to vector<128x128xbf16>
    %c0_69 = arith.constant 0 : index
    %c0_70 = arith.constant 0 : index
    %c0_71 = arith.constant 0 : index
    %84 = vector.load %arg4[%c0_69, %c0_70, %c0_71] : memref<1x128x128xbf16, #tpu.memory_space<vmem>>, vector<1x128x128xbf16>
    %85 = vector.shape_cast %84 : vector<1x128x128xbf16> to vector<128x128xbf16>
    %86 = vector.shape_cast %83 : vector<128x128xbf16> to vector<1x128x128xbf16>
    tpu.vector_store %arg4[%c0_69, %c0_70, %c0_71], %86 {strides = array<i32>} : memref<1x128x128xbf16, #tpu.memory_space<vmem>>, vector<1x128x128xbf16>,
    %cst_72 = arith.constant dense<0.000000e+00> : vector<128xf32>
    %87 = vector.multi_reduction <add>, %82, %cst_72 [0] : vector<128x128xf32> to vector<128xf32>
    %88 = vector.shape_cast %87 : vector<128xf32> to vector<1x128xf32>
    %cst_73 = arith.constant 7.812500e-03 : f32
    %89 = vector.broadcast %cst_73 : f32 to vector<1x128xf32>
    %90 = arith.mulf %88, %89 : vector<1x128xf32>
    %91 = vector.broadcast %90 : vector<1x128xf32> to vector<128x128xf32>
    %92 = arith.subf %82, %91 : vector<128x128xf32>
    %93 = arith.mulf %92, %92 : vector<128x128xf32>
    %cst_74 = arith.constant dense<0.000000e+00> : vector<128xf32>
    %94 = vector.multi_reduction <add>, %93, %cst_74 [0] : vector<128x128xf32> to vector<128xf32>
    %95 = vector.shape_cast %94 : vector<128xf32> to vector<1x128xf32>
    %96 = tpu.concatenate %90, %95 in 0 : vector<1x128xf32>, vector<1x128xf32> -> vector<2x128xf32>
    %c0_75 = arith.constant 0 : index
    %c0_76 = arith.constant 0 : index
    %c0_77 = arith.constant 0 : index
    %c0_78 = arith.constant 0 : index
    %97 = vector.load %arg5[%c0_75, %c0_76, %c0_77, %c0_78] : memref<1x1x2x128xf32, #tpu.memory_space<vmem>>, vector<1x1x2x128xf32>
    %98 = vector.shape_cast %97 : vector<1x1x2x128xf32> to vector<2x128xf32>
    %99 = vector.shape_cast %96 : vector<2x128xf32> to vector<1x1x2x128xf32>
    tpu.vector_store %arg5[%c0_75, %c0_76, %c0_77, %c0_78], %99 {strides = array<i32>} : memref<1x1x2x128xf32, #tpu.memory_space<vmem>>, vector<1x1x2x128xf32>,
    return
  }
  func.func @transform_0(%arg0: i32, %arg1: i32) -> (i32, i32, i32, i32, i32) {
    %c0_i32 = arith.constant 0 : i32
    %c0_i32_0 = arith.constant 0 : i32
    %c0_i32_1 = arith.constant 0 : i32
    %c0_i32_2 = arith.constant 0 : i32
    %c0_i32_3 = arith.constant 0 : i32
    return %arg0, %c0_i32, %c0_i32_0, %c0_i32_1, %c0_i32_2 : i32, i32, i32, i32, i32
  }
  func.func @transform_1(%arg0: i32, %arg1: i32) -> (i32, i32, i32) {
    %c0_i32 = arith.constant 0 : i32
    %c0_i32_0 = arith.constant 0 : i32
    %c0_i32_1 = arith.constant 0 : i32
    %c0_i32_2 = arith.constant 0 : i32
    return %c0_i32, %c0_i32_0, %c0_i32_1 : i32, i32, i32
  }
  func.func @transform_2(%arg0: i32, %arg1: i32) -> (i32, i32, i32) {
    %c0_i32 = arith.constant 0 : i32
    %c0_i32_0 = arith.constant 0 : i32
    return %arg0, %arg1, %c0_i32 : i32, i32, i32
  }
  func.func @transform_3(%arg0: i32, %arg1: i32) -> (i32, i32, i32, i32) {
    %c0_i32 = arith.constant 0 : i32
    %c0_i32_0 = arith.constant 0 : i32
    %c0_i32_1 = arith.constant 0 : i32
    return %arg0, %arg1, %c0_i32, %c0_i32_0 : i32, i32, i32, i32
  }
}

</mosaic_0001>

<llo_original>
// kernel: tpu_custom_call.1
$region0: #{tpu_custom_call.1}
  #allocation0 [shape = 'u32[]', space=smem, size = 0x4, offset = 0x4, fixed_abs, tag = 'smem constant byte address 0x4 - core index']
  #allocation1 [shape = 'u32[72,128]{1,0:T(1,128)}', space=vmem, size = 0x9000, scoped, tag = 'internal scratch']
  %s0 = inlined_call_operand.vmem [shape: bf16[2,1,18,18,4], index: 0, kind: input, shape index: {}]
  %s1 = inlined_call_operand.vmem [shape: bf16[9,4,128], index: 1, kind: input, shape index: {}]
  %s2 = inlined_call_operand.hbm [shape: bf16[2,256,128], index: 2, kind: output, shape index: {0}]
  %s3 = inlined_call_operand.hbm [shape: f32[2,2,2,128], index: 3, kind: output, shape index: {1}]
  %4 = xla_tuple %s2, %s3
  %s5 = sld [smem:[#allocation0]]
  $region49: #{tpu_custom_call.1} parent=0
    _
  %s7 = ssub.s32 1, %s5
  %s8 = scalar_select 0, %s7, %s5
  $region1: #{tpu_custom_call.1} parent=0
    #allocation2 [shape = 'u8[65536]{0}', space=vmem, size = 0x10000, scoped, tag = 'output window, operand 0']
    #allocation3 [shape = 's32[2]{0}', space=sflag, size = 0x8, scoped, tag = 'scoped memory for tpu_custom_call.1']
    #allocation4 [shape = 'u8[2048]{0}', space=vmem, size = 0x800, scoped, tag = 'output window, operand 1']
    #allocation5 [shape = 's32[2]{0}', space=sflag, size = 0x8, scoped, tag = 'scoped memory for tpu_custom_call.1']
    %9 = vsyncpa [#allocation3], 0
    %s10 = scalar_lea.sflag [#allocation3], 1
    %11 = vsyncpa %s10, 0
    %12 = vsyncpa [#allocation5], 0
    %s13 = scalar_lea.sflag [#allocation5], 1
    %14 = vsyncpa %s13, 0
    loop: start=0, step=1, limit=6
    $region2: #{tpu_custom_call.1} parent=1 // loop_pre_header
      _
    $region3: #{tpu_custom_call.1} parent=1 // loop_header
      %s16 = sphi 0, %s20
      %p17 = scmp.ge.s32.totalorder %s16, 6
      %s23 = sphi 0, %s35
      %s24 = sphi 0, %s31
      %s25 = sphi 0, %s23
      %s26 = sphi 0, %s24
      %s27 = sphi 0, %s25
      %s28 = sphi 0, %s26
      %s38 = sphi 0, %s40
      %s41 = sphi 0, %s38
      %s42 = sphi 0, %s41
      %s58 = sphi 0, %s42
      %s62 = sphi 0, %s62
      %s64 = sphi 0, %s62
      %s65 = sphi 0, %s64
      %s79 = sphi 0, %s65
      %s87 = sphi 0, %s89
      %s90 = sphi 0, %s87
      %s91 = sphi 0, %s90
      %s107 = sphi 0, %s91
      %s115 = sphi 0, %s117
      %s118 = sphi 0, %s115
      %s119 = sphi 0, %s118
      %s135 = sphi 0, %s119
    $region4: #{tpu_custom_call.1} parent=1 // loop_header_branch
      %19 = sbr.rel (%p17) target = $region8
    $region5: #{tpu_custom_call.1} parent=1 // loop_body
      %s21 = ssub.s32 %s16, 1
      %s22 = ssub.s32 %s16, 2
      %s29 = sadd.s32 1, %s24
      %p30 = scmp.ge.s32.totalorder %s29, 2
      %s31 = scalar_select %p30, 0, %s29
      %s32 = sadd.s32 1, %s23
      %s33 = scalar_select %p30, %s32, %s23
      %p34 = scmp.ge.s32.totalorder %s33, 2
      %s35 = scalar_select %p34, 0, %s33
      %s36 = ssub.s32 %s23, %s35
      %p37 = scmp.eq.s32.totalorder %s36, 0
      %s39 = sadd.s32 %s38, 1
      %s40 = scalar_select %p37, %s38, %s39
      %p43 = pneg %p37
      %p44 = scmp.eq.s32.totalorder %s16, 3
      %p45 = por %p43, %p44
      %p46 = scmp.ne.s32.totalorder %s38, %s41
      %p47 = scmp.eq.s32.totalorder %s16, 0
      %p48 = por %p46, %p47
      %p49 = scmp.ne.s32.totalorder %s38, %s41
      %p50 = scmp.eq.s32.totalorder %s21, 3
      %p51 = por %p49, %p50
      %p52 = scmp.ne.s32.totalorder %s41, %s42
      %p53 = scmp.eq.s32.totalorder %s21, 0
      %p54 = por %p52, %p53
      %p55 = scmp.ne.s32.totalorder %s41, %s42
      %p56 = scmp.eq.s32.totalorder %s22, 3
      %p57 = por %p55, %p56
      %p59 = scmp.ne.s32.totalorder %s42, %s58
      %p60 = scmp.eq.s32.totalorder %s22, 0
      %p61 = por %p59, %p60
      %s63 = sadd.s32 %s62, 1
      %p66 = scmp.eq.s32.totalorder %s16, 3
      %p67 = scmp.ne.s32.totalorder %s62, %s64
      %p68 = scmp.eq.s32.totalorder %s16, 0
      %p69 = por %p67, %p68
      %p70 = scmp.ne.s32.totalorder %s62, %s64
      %p71 = scmp.eq.s32.totalorder %s21, 3
      %p72 = por %p70, %p71
      %p73 = scmp.ne.s32.totalorder %s64, %s65
      %p74 = scmp.eq.s32.totalorder %s21, 0
      %p75 = por %p73, %p74
      %p76 = scmp.ne.s32.totalorder %s64, %s65
      %p77 = scmp.eq.s32.totalorder %s22, 3
      %p78 = por %p76, %p77
      %p80 = scmp.ne.s32.totalorder %s65, %s79
      %p81 = scmp.eq.s32.totalorder %s22, 0
      %p82 = por %p80, %p81
      %s83 = ssub.s32 %s23, %s35
      %s84 = ssub.s32 %s24, %s31
      %s85 = sor.u32 %s83, %s84
      %p86 = scmp.eq.s32.totalorder %s85, 0
      %s88 = sadd.s32 %s87, 1
      %s89 = scalar_select %p86, %s87, %s88
      %p92 = pneg %p86
      %p93 = scmp.eq.s32.totalorder %s16, 3
      %p94 = por %p92, %p93
      %p95 = scmp.ne.s32.totalorder %s87, %s90
      %p96 = scmp.eq.s32.totalorder %s16, 0
      %p97 = por %p95, %p96
      %p98 = scmp.ne.s32.totalorder %s87, %s90
      %p99 = scmp.eq.s32.totalorder %s21, 3
      %p100 = por %p98, %p99
      %p101 = scmp.ne.s32.totalorder %s90, %s91
      %p102 = scmp.eq.s32.totalorder %s21, 0
      %p103 = por %p101, %p102
      %p104 = scmp.ne.s32.totalorder %s90, %s91
      %p105 = scmp.eq.s32.totalorder %s22, 3
      %p106 = por %p104, %p105
      %p108 = scmp.ne.s32.totalorder %s91, %s107
      %p109 = scmp.eq.s32.totalorder %s22, 0
      %p110 = por %p108, %p109
      %s111 = ssub.s32 %s23, %s35
      %s112 = ssub.s32 %s24, %s31
      %s113 = sor.u32 %s111, %s112
      %p114 = scmp.eq.s32.totalorder %s113, 0
      %s116 = sadd.s32 %s115, 1
      %s117 = scalar_select %p114, %s115, %s116
      %p120 = pneg %p114
      %p121 = scmp.eq.s32.totalorder %s16, 3
      %p122 = por %p120, %p121
      %p123 = scmp.ne.s32.totalorder %s115, %s118
      %p124 = scmp.eq.s32.totalorder %s16, 0
      %p125 = por %p123, %p124
      %p126 = scmp.ne.s32.totalorder %s115, %s118
      %p127 = scmp.eq.s32.totalorder %s21, 3
      %p128 = por %p126, %p127
      %p129 = scmp.ne.s32.totalorder %s118, %s119
      %p130 = scmp.eq.s32.totalorder %s21, 0
      %p131 = por %p129, %p130
      %p132 = scmp.ne.s32.totalorder %s118, %s119
      %p133 = scmp.eq.s32.totalorder %s22, 3
      %p134 = por %p132, %p133
      %p136 = scmp.ne.s32.totalorder %s119, %s135
      %p137 = scmp.eq.s32.totalorder %s22, 0
      %p138 = por %p136, %p137
      %p139 = scmp.le.s32.totalorder 1, %s16
      %p140 = scmp.lt.s32.totalorder %s16, 5
      %p141 = pnand %p139, %p140
      %p142 = pneg %p141
      // Predicated region
      $region9: #{tpu_custom_call.1} parent=5 // pred_check
        _
      $region10: #{tpu_custom_call.1} parent=5 // pred_check_branch
        %144 = sbr.rel (%p141) target = $region12
      $region11: #{tpu_custom_call.1} parent=5 // pred_region
        %s145 = ssub.s32 %s16, 1
        // Predicated region
        $region13: #{tpu_custom_call.1} parent=11 // pred_check
          %p146 = pneg %p75
        $region14: #{tpu_custom_call.1} parent=11 // pred_check_branch
          %148 = sbr.rel (%p146) target = $region16
        $region15: #{tpu_custom_call.1} parent=11 // pred_region
          _
        $region16: #{tpu_custom_call.1} parent=11 // pred_fallthru
          _
      $region12: #{tpu_custom_call.1} parent=5 // pred_fallthru
        _
      %p149 = scmp.lt.s32.totalorder %s16, 4
      // Predicated region
      $region17: #{tpu_custom_call.1} parent=5 // pred_check
        %p150 = pneg %p149
      $region18: #{tpu_custom_call.1} parent=5 // pred_check_branch
        %152 = sbr.rel (%p150) target = $region20
      $region19: #{tpu_custom_call.1} parent=5 // pred_region
        // Predicated region
        $region21: #{tpu_custom_call.1} parent=19 // pred_check
          %p153 = pneg %p48
        $region22: #{tpu_custom_call.1} parent=19 // pred_check_branch
          %155 = sbr.rel (%p153) target = $region24
        $region23: #{tpu_custom_call.1} parent=19 // pred_region
          %p156 = scmp.lt.s32.totalorder %s23, 1
          %s157 = scalar_select %p156, %s23, 1
          %s158 = smul.addr %s157, 54
          %s159 = smul.addr %s158, 4
          %s160 = scalar_lea.vmem %s0, %s159
        $region24: #{tpu_custom_call.1} parent=19 // pred_fallthru
          _
      $region20: #{tpu_custom_call.1} parent=5 // pred_fallthru
        _
      %p161 = scmp.le.s32.totalorder 1, %s16
      %p162 = scmp.lt.s32.totalorder %s16, 5
      %p163 = pnand %p161, %p162
      %p164 = pneg %p163
      // Predicated region
      $region25: #{tpu_custom_call.1} parent=5 // pred_check
        _
      $region26: #{tpu_custom_call.1} parent=5 // pred_check_branch
        %166 = sbr.rel (%p163) target = $region28
      $region27: #{tpu_custom_call.1} parent=5 // pred_region
        %s167 = ssub.s32 %s16, 1
        %p168 = scmp.lt.s32.totalorder %s25, 1
        %s169 = scalar_select %p168, %s25, 1
        %s170 = smul.addr %s169, 54
        %s171 = smul.addr %s170, 4
        %s172 = scalar_lea.vmem %s0, %s171
        %p173 = pneg %p54
        %p174 = pneg %p51
        %p175 = pneg %p75
        %p176 = pneg %p72
        %p177 = pneg %p103
        %p178 = pneg %p100
        %s179 = sand.u32 %s90, 1
        %s180 = scalar_lea.sflag [#allocation3], %s179
        %s181 = sand.u32 %s90, 1
        %s182 = smul.addr %s181, 64
        %s183 = scalar_lea.vmem [#allocation2], %s182
        %p184 = pneg %p131
        %p185 = pneg %p128
        %s186 = sand.u32 %s118, 1
        %s187 = scalar_lea.sflag [#allocation5], %s186
        %s188 = sand.u32 %s118, 1
        %s189 = smul.addr %s188, 2
        %s190 = scalar_lea.vmem [#allocation4], %s189
        %p191 = scmp.lt.s32.totalorder %s25, 1
        %s192 = scalar_select %p191, %s25, 1
        %s193 = smul.addr %s192, 54
        %s194 = smul.addr %s193, 4
        %s195 = scalar_lea.vmem %s0, %s194
        %s196 = smul.u32 16, %s26
        %s198 = smul.u32 %s26, 8
        %s199 = smul.u32 %s198, 3
        %s200 = smul.addr %s199, 4
        %s201 = scalar_lea.vmem %s195, %s200
        %v202 = vld [vmem:[%s201] sm:$0xf]
        %v203 = vld [vmem:[%s201 + $0x4] sm:$0xf]
        %v204 = vld [vmem:[%s201 + $0xc] sm:$0xf]
        %v205 = vld [vmem:[%s201 + $0x10] sm:$0xf]
        %v206 = vld [vmem:[%s201 + $0x18] sm:$0xf]
        %v207 = vld [vmem:[%s201 + $0x1c] sm:$0xf]
        %v208 = vld [vmem:[%s201 + $0x24] sm:$0xf]
        %v209 = vld [vmem:[%s201 + $0x28] sm:$0xf]
        %v210 = vld [vmem:[%s201 + $0x30] sm:$0xf]
        %v211 = vld [vmem:[%s201 + $0x34] sm:$0xf]
        %v212 = vld [vmem:[%s201 + $0x3c] sm:$0xf]
        %v213 = vld [vmem:[%s201 + $0x40] sm:$0xf]
        %v214 = vld [vmem:[%s201 + $0x48] sm:$0xf]
        %v215 = vld [vmem:[%s201 + $0x4c] sm:$0xf]
        %v216 = vld [vmem:[%s201 + $0x54] sm:$0xf]
        %v217 = vld [vmem:[%s201 + $0x58] sm:$0xf]
        %v218 = vld [vmem:[%s1] sm:$0x3]
        %v219 = vld [vmem:[%s201 + $0x8] sm:$0x1]
        %v220 = vld [vmem:[%s201 + $0x14] sm:$0x1]
        %v221 = vld [vmem:[%s201 + $0x20] sm:$0x1]
        %v222 = vld [vmem:[%s201 + $0x2c] sm:$0x1]
        %v223 = vld [vmem:[%s201 + $0x38] sm:$0x1]
        %v224 = vld [vmem:[%s201 + $0x44] sm:$0x1]
        %v225 = vld [vmem:[%s201 + $0x50] sm:$0x1]
        %v226 = vld [vmem:[%s201 + $0x5c] sm:$0x1]
        %vm227 = vsmask.f32 3328
        %vm228 = vsmask.f32 7440
        %vm229 = vmor %vm227, %vm228
        %v231 = vshrl.u32 %v202, 16
        %v233 = vrot.slane %v231, 4
        %v234 = vshll.u32 %v202, 16
        %v236 = vrot.slane %v234, 5
        %v237 = vor.u32 %v233, %v236
        %v238 = vrot.slane %v237, 4
        %v240 = vshll.u32 %v203, 16
        %v242 = vrot.slane %v240, 5
        %v243 = vsel %vm229, %v238, %v242
        %v244 = vshrl.u32 %v203, 16
        %v246 = vrot.slane %v244, 4
        %v247 = vor.u32 %v246, %v242
        %v248 = vrot.slane %v247, 4
        %v250 = vshll.u32 %v219, 16
        %v252 = vrot.slane %v250, 5
        %v253 = vsel %vm229, %v248, %v252
        %v255 = vshrl.u32 %v204, 16
        %v257 = vrot.slane %v255, 4
        %v258 = vshll.u32 %v204, 16
        %v260 = vrot.slane %v258, 5
        %v261 = vor.u32 %v257, %v260
        %v262 = vrot.slane %v261, 4
        %v264 = vshll.u32 %v205, 16
        %v266 = vrot.slane %v264, 5
        %v267 = vsel %vm229, %v262, %v266
        %v268 = vshrl.u32 %v205, 16
        %v270 = vrot.slane %v268, 4
        %v271 = vor.u32 %v270, %v266
        %v272 = vrot.slane %v271, 4
        %v274 = vshll.u32 %v220, 16
        %v276 = vrot.slane %v274, 5
        %v277 = vsel %vm229, %v272, %v276
        %v279 = vshrl.u32 %v206, 16
        %v281 = vrot.slane %v279, 4
        %v282 = vshll.u32 %v206, 16
        %v284 = vrot.slane %v282, 5
        %v285 = vor.u32 %v281, %v284
        %v286 = vrot.slane %v285, 4
        %v288 = vshll.u32 %v207, 16
        %v290 = vrot.slane %v288, 5
        %v291 = vsel %vm229, %v286, %v290
        %v292 = vshrl.u32 %v207, 16
        %v294 = vrot.slane %v292, 4
        %v295 = vor.u32 %v294, %v290
        %v296 = vrot.slane %v295, 4
        %v298 = vshll.u32 %v221, 16
        %v300 = vrot.slane %v298, 5
        %v301 = vsel %vm229, %v296, %v300
        %v303 = vshrl.u32 %v208, 16
        %v305 = vrot.slane %v303, 4
        %v306 = vshll.u32 %v208, 16
        %v308 = vrot.slane %v306, 5
        %v309 = vor.u32 %v305, %v308
        %v310 = vrot.slane %v309, 4
        %v312 = vshll.u32 %v209, 16
        %v314 = vrot.slane %v312, 5
        %v315 = vsel %vm229, %v310, %v314
        %v316 = vshrl.u32 %v209, 16
        %v318 = vrot.slane %v316, 4
        %v319 = vor.u32 %v318, %v314
        %v320 = vrot.slane %v319, 4
        %v322 = vshll.u32 %v222, 16
        %v324 = vrot.slane %v322, 5
        %v325 = vsel %vm229, %v320, %v324
        %v327 = vshrl.u32 %v210, 16
        %v329 = vrot.slane %v327, 4
        %v330 = vshll.u32 %v210, 16
        %v332 = vrot.slane %v330, 5
        %v333 = vor.u32 %v329, %v332
        %v334 = vrot.slane %v333, 4
        %v336 = vshll.u32 %v211, 16
        %v338 = vrot.slane %v336, 5
        %v339 = vsel %vm229, %v334, %v338
        %v340 = vshrl.u32 %v211, 16
        %v342 = vrot.slane %v340, 4
        %v343 = vor.u32 %v342, %v338
        %v344 = vrot.slane %v343, 4
        %v346 = vshll.u32 %v223, 16
        %v348 = vrot.slane %v346, 5
        %v349 = vsel %vm229, %v344, %v348
        %v351 = vshrl.u32 %v212, 16
        %v353 = vrot.slane %v351, 4
        %v354 = vshll.u32 %v212, 16
        %v356 = vrot.slane %v354, 5
        %v357 = vor.u32 %v353, %v356
        %v358 = vrot.slane %v357, 4
        %v360 = vshll.u32 %v213, 16
        %v362 = vrot.slane %v360, 5
        %v363 = vsel %vm229, %v358, %v362
        %v364 = vshrl.u32 %v213, 16
        %v366 = vrot.slane %v364, 4
        %v367 = vor.u32 %v366, %v362
        %v368 = vrot.slane %v367, 4
        %v370 = vshll.u32 %v224, 16
        %v372 = vrot.slane %v370, 5
        %v373 = vsel %vm229, %v368, %v372
        %v375 = vshrl.u32 %v214, 16
        %v377 = vrot.slane %v375, 4
        %v378 = vshll.u32 %v214, 16
        %v380 = vrot.slane %v378, 5
        %v381 = vor.u32 %v377, %v380
        %v382 = vrot.slane %v381, 4
        %v384 = vshll.u32 %v215, 16
        %v386 = vrot.slane %v384, 5
        %v387 = vsel %vm229, %v382, %v386
        %v388 = vshrl.u32 %v215, 16
        %v390 = vrot.slane %v388, 4
        %v391 = vor.u32 %v390, %v386
        %v392 = vrot.slane %v391, 4
        %v394 = vshll.u32 %v225, 16
        %v396 = vrot.slane %v394, 5
        %v397 = vsel %vm229, %v392, %v396
        %v399 = vshrl.u32 %v216, 16
        %v401 = vrot.slane %v399, 4
        %v402 = vshll.u32 %v216, 16
        %v404 = vrot.slane %v402, 5
        %v405 = vor.u32 %v401, %v404
        %v406 = vrot.slane %v405, 4
        %v408 = vshll.u32 %v217, 16
        %v410 = vrot.slane %v408, 5
        %v411 = vsel %vm229, %v406, %v410
        %v412 = vshrl.u32 %v217, 16
        %v414 = vrot.slane %v412, 4
        %v415 = vor.u32 %v414, %v410
        %v416 = vrot.slane %v415, 4
        %v418 = vshll.u32 %v226, 16
        %v420 = vrot.slane %v418, 5
        %v421 = vsel %vm229, %v416, %v420
        %s422 = scalar_lea.vmem %s1, 2
        %v423 = vld [vmem:[%s422] sm:$0x3]
        %v424 = vunpack.c.l.b16 %v243
        %v425 = vunpack.c.l.b16 %v253
        %v426 = vunpack.c.l.b16 %v267
        %v427 = vunpack.c.l.b16 %v277
        %v428 = vunpack.c.l.b16 %v291
        %v429 = vunpack.c.l.b16 %v301
        %v430 = vunpack.c.l.b16 %v315
        %v431 = vunpack.c.l.b16 %v325
        %v432 = vunpack.c.l.b16 %v339
        %v433 = vunpack.c.l.b16 %v349
        %v434 = vunpack.c.l.b16 %v363
        %v435 = vunpack.c.l.b16 %v373
        %v436 = vunpack.c.l.b16 %v387
        %v437 = vunpack.c.l.b16 %v397
        %v438 = vunpack.c.l.b16 %v411
        %v439 = vunpack.c.l.b16 %v421
        %v440 = vpack.c.b16 %v425, %v424
        %v441 = vpack.c.b16 %v427, %v426
        %v442 = vpack.c.b16 %v429, %v428
        %v443 = vpack.c.b16 %v431, %v430
        %v444 = vpack.c.b16 %v433, %v432
        %v445 = vpack.c.b16 %v435, %v434
        %v446 = vpack.c.b16 %v437, %v436
        %v447 = vpack.c.b16 %v439, %v438
        %vm448 = vcmask 31744
        %v450 = vsel %vm448, %v440, 0
        %v453 = vsel %vm448, %v441, 0
        %v456 = vsel %vm448, %v442, 0
        %v459 = vsel %vm448, %v443, 0
        %v462 = vsel %vm448, %v444, 0
        %v465 = vsel %vm448, %v445, 0
        %v468 = vsel %vm448, %v446, 0
        %v471 = vsel %vm448, %v447, 0
        %vm473 = vcmask 1041408
        %v475 = vsel %vm473, %v423, 0
        %477 = vmatpush.bf16.msra.mxu0 0
        %478 = vmatpush.bf16.msra.mxu0 0
        %479 = vmatpush.bf16.msra.mxu0 0
        %480 = vmatpush.bf16.msra.mxu0 0
        %481 = vmatpush.bf16.msra.mxu0 0
        %482 = vmatpush.bf16.msra.mxu0 0
        %483 = vmatpush.bf16.msra.mxu0 0
        %484 = vmatpush.bf16.msra.mxu0 %v475
        %485 = vmatmul.bf16.gmra.mxu0 %v450
        %v486 = vpop.f32.mrf.mxu0
        %v487 = vadd.f32 0.0, %v486
        %v488 = vpop.f32.mrf.mxu0
        %v489 = vadd.f32 0.0, %v488
        %490 = vmatmul.bf16.gmra.mxu0 %v453
        %v491 = vpop.f32.mrf.mxu0
        %v492 = vadd.f32 0.0, %v491
        %v493 = vpop.f32.mrf.mxu0
        %v494 = vadd.f32 0.0, %v493
        %495 = vmatmul.bf16.gmra.mxu0 %v456
        %v496 = vpop.f32.mrf.mxu0
        %v497 = vadd.f32 0.0, %v496
        %v498 = vpop.f32.mrf.mxu0
        %v499 = vadd.f32 0.0, %v498
        %500 = vmatmul.bf16.gmra.mxu0 %v459
        %v501 = vpop.f32.mrf.mxu0
        %v502 = vadd.f32 0.0, %v501
        %v503 = vpop.f32.mrf.mxu0
        %v504 = vadd.f32 0.0, %v503
        %505 = vmatmul.bf16.gmra.mxu0 %v462
        %v506 = vpop.f32.mrf.mxu0
        %v507 = vadd.f32 0.0, %v506
        %v508 = vpop.f32.mrf.mxu0
        %v509 = vadd.f32 0.0, %v508
        %510 = vmatmul.bf16.gmra.mxu0 %v465
        %v511 = vpop.f32.mrf.mxu0
        %v512 = vadd.f32 0.0, %v511
        %v513 = vpop.f32.mrf.mxu0
        %v514 = vadd.f32 0.0, %v513
        %515 = vmatmul.bf16.gmra.mxu0 %v468
        %v516 = vpop.f32.mrf.mxu0
        %v517 = vadd.f32 0.0, %v516
        %v518 = vpop.f32.mrf.mxu0
        %v519 = vadd.f32 0.0, %v518
        %520 = vmatmul.bf16.gmra.mxu0 %v471
        %v521 = vpop.f32.mrf.mxu0
        %v522 = vadd.f32 0.0, %v521
        %v523 = vpop.f32.mrf.mxu0
        %v524 = vadd.f32 0.0, %v523
        %525 = vdwg.mxu0
        %v542 = vunpack.c.l.b16 %v202
        %v543 = vunpack.c.l.b16 %v203
        %v544 = vunpack.c.l.b16 %v204
        %v545 = vunpack.c.l.b16 %v205
        %v546 = vunpack.c.l.b16 %v206
        %v547 = vunpack.c.l.b16 %v207
        %v548 = vunpack.c.l.b16 %v208
        %v549 = vunpack.c.l.b16 %v209
        %v550 = vunpack.c.l.b16 %v210
        %v551 = vunpack.c.l.b16 %v211
        %v552 = vunpack.c.l.b16 %v212
        %v553 = vunpack.c.l.b16 %v213
        %v554 = vunpack.c.l.b16 %v214
        %v555 = vunpack.c.l.b16 %v215
        %v556 = vunpack.c.l.b16 %v216
        %v557 = vunpack.c.l.b16 %v217
        %v558 = vpack.c.b16 %v543, %v542
        %v559 = vpack.c.b16 %v545, %v544
        %v560 = vpack.c.b16 %v547, %v546
        %v561 = vpack.c.b16 %v549, %v548
        %v562 = vpack.c.b16 %v551, %v550
        %v563 = vpack.c.b16 %v553, %v552
        %v564 = vpack.c.b16 %v555, %v554
        %v565 = vpack.c.b16 %v557, %v556
        %v567 = vsel %vm448, %v558, 0
        %v570 = vsel %vm448, %v559, 0
        %v573 = vsel %vm448, %v560, 0
        %v576 = vsel %vm448, %v561, 0
        %v579 = vsel %vm448, %v562, 0
        %v582 = vsel %vm448, %v563, 0
        %v585 = vsel %vm448, %v564, 0
        %v588 = vsel %vm448, %v565, 0
        %v591 = vsel %vm473, %v218, 0
        %593 = vmatpush.bf16.msra.mxu0 0
        %594 = vmatpush.bf16.msra.mxu0 0
        %595 = vmatpush.bf16.msra.mxu0 0
        %596 = vmatpush.bf16.msra.mxu0 0
        %597 = vmatpush.bf16.msra.mxu0 0
        %598 = vmatpush.bf16.msra.mxu0 0
        %599 = vmatpush.bf16.msra.mxu0 0
        %600 = vmatpush.bf16.msra.mxu0 %v591
        %601 = vmatmul.bf16.gmra.mxu0 %v567
        %v602 = vpop.f32.mrf.mxu0
        %v603 = vadd.f32 %v487, %v602
        %v604 = vpop.f32.mrf.mxu0
        %v605 = vadd.f32 %v489, %v604
        %606 = vmatmul.bf16.gmra.mxu0 %v570
        %v607 = vpop.f32.mrf.mxu0
        %v608 = vadd.f32 %v492, %v607
        %v609 = vpop.f32.mrf.mxu0
        %v610 = vadd.f32 %v494, %v609
        %611 = vmatmul.bf16.gmra.mxu0 %v573
        %v612 = vpop.f32.mrf.mxu0
        %v613 = vadd.f32 %v497, %v612
        %v614 = vpop.f32.mrf.mxu0
        %v615 = vadd.f32 %v499, %v614
        %616 = vmatmul.bf16.gmra.mxu0 %v576
        %v617 = vpop.f32.mrf.mxu0
        %v618 = vadd.f32 %v502, %v617
        %v619 = vpop.f32.mrf.mxu0
        %v620 = vadd.f32 %v504, %v619
        %621 = vmatmul.bf16.gmra.mxu0 %v579
        %v622 = vpop.f32.mrf.mxu0
        %v623 = vadd.f32 %v507, %v622
        %v624 = vpop.f32.mrf.mxu0
        %v625 = vadd.f32 %v509, %v624
        %626 = vmatmul.bf16.gmra.mxu0 %v582
        %v627 = vpop.f32.mrf.mxu0
        %v628 = vadd.f32 %v512, %v627
        %v629 = vpop.f32.mrf.mxu0
        %v630 = vadd.f32 %v514, %v629
        %631 = vmatmul.bf16.gmra.mxu0 %v585
        %v632 = vpop.f32.mrf.mxu0
        %v633 = vadd.f32 %v517, %v632
        %v634 = vpop.f32.mrf.mxu0
        %v635 = vadd.f32 %v519, %v634
        %636 = vmatmul.bf16.gmra.mxu0 %v588
        %v637 = vpop.f32.mrf.mxu0
        %v638 = vadd.f32 %v522, %v637
        %v639 = vpop.f32.mrf.mxu0
        %v640 = vadd.f32 %v524, %v639
        %641 = vdwg.mxu0
        %v642 = vld [vmem:[%s201] sm:$0xe]
        %v643 = vld [vmem:[%s201 + $0xc] sm:$0xe]
        %v644 = vld [vmem:[%s201 + $0x18] sm:$0xe]
        %v645 = vld [vmem:[%s201 + $0x24] sm:$0xe]
        %v646 = vld [vmem:[%s201 + $0x30] sm:$0xe]
        %v647 = vld [vmem:[%s201 + $0x3c] sm:$0xe]
        %v648 = vld [vmem:[%s201 + $0x48] sm:$0xe]
        %v649 = vld [vmem:[%s201 + $0x54] sm:$0xe]
        %vm666 = vcmask 1042432
        %vm667 = vcmask 1046532
        %vm668 = vmor %vm666, %vm667
        %v669 = vrot.slane %v642, 5
        %v670 = vrot.slane %v669, 4
        %v671 = vrot.slane %v203, 5
        %v672 = vsel %vm668, %v670, %v671
        %v673 = vrot.slane %v671, 4
        %v674 = vrot.slane %v219, 5
        %v675 = vsel %vm668, %v673, %v674
        %v676 = vrot.slane %v643, 5
        %v677 = vrot.slane %v676, 4
        %v678 = vrot.slane %v205, 5
        %v679 = vsel %vm668, %v677, %v678
        %v680 = vrot.slane %v678, 4
        %v681 = vrot.slane %v220, 5
        %v682 = vsel %vm668, %v680, %v681
        %v683 = vrot.slane %v644, 5
        %v684 = vrot.slane %v683, 4
        %v685 = vrot.slane %v207, 5
        %v686 = vsel %vm668, %v684, %v685
        %v687 = vrot.slane %v685, 4
        %v688 = vrot.slane %v221, 5
        %v689 = vsel %vm668, %v687, %v688
        %v690 = vrot.slane %v645, 5
        %v691 = vrot.slane %v690, 4
        %v692 = vrot.slane %v209, 5
        %v693 = vsel %vm668, %v691, %v692
        %v694 = vrot.slane %v692, 4
        %v695 = vrot.slane %v222, 5
        %v696 = vsel %vm668, %v694, %v695
        %v697 = vrot.slane %v646, 5
        %v698 = vrot.slane %v697, 4
        %v699 = vrot.slane %v211, 5
        %v700 = vsel %vm668, %v698, %v699
        %v701 = vrot.slane %v699, 4
        %v702 = vrot.slane %v223, 5
        %v703 = vsel %vm668, %v701, %v702
        %v704 = vrot.slane %v647, 5
        %v705 = vrot.slane %v704, 4
        %v706 = vrot.slane %v213, 5
        %v707 = vsel %vm668, %v705, %v706
        %v708 = vrot.slane %v706, 4
        %v709 = vrot.slane %v224, 5
        %v710 = vsel %vm668, %v708, %v709
        %v711 = vrot.slane %v648, 5
        %v712 = vrot.slane %v711, 4
        %v713 = vrot.slane %v215, 5
        %v714 = vsel %vm668, %v712, %v713
        %v715 = vrot.slane %v713, 4
        %v716 = vrot.slane %v225, 5
        %v717 = vsel %vm668, %v715, %v716
        %v718 = vrot.slane %v649, 5
        %v719 = vrot.slane %v718, 4
        %v720 = vrot.slane %v217, 5
        %v721 = vsel %vm668, %v719, %v720
        %v722 = vrot.slane %v720, 4
        %v723 = vrot.slane %v226, 5
        %v724 = vsel %vm668, %v722, %v723
        %s725 = scalar_lea.vmem %s1, 4
        %v726 = vld [vmem:[%s725] sm:$0x3]
        %v727 = vunpack.c.l.b16 %v672
        %v728 = vunpack.c.l.b16 %v675
        %v729 = vunpack.c.l.b16 %v679
        %v730 = vunpack.c.l.b16 %v682
        %v731 = vunpack.c.l.b16 %v686
        %v732 = vunpack.c.l.b16 %v689
        %v733 = vunpack.c.l.b16 %v693
        %v734 = vunpack.c.l.b16 %v696
        %v735 = vunpack.c.l.b16 %v700
        %v736 = vunpack.c.l.b16 %v703
        %v737 = vunpack.c.l.b16 %v707
        %v738 = vunpack.c.l.b16 %v710
        %v739 = vunpack.c.l.b16 %v714
        %v740 = vunpack.c.l.b16 %v717
        %v741 = vunpack.c.l.b16 %v721
        %v742 = vunpack.c.l.b16 %v724
        %v743 = vpack.c.b16 %v728, %v727
        %v744 = vpack.c.b16 %v730, %v729
        %v745 = vpack.c.b16 %v732, %v731
        %v746 = vpack.c.b16 %v734, %v733
        %v747 = vpack.c.b16 %v736, %v735
        %v748 = vpack.c.b16 %v738, %v737
        %v749 = vpack.c.b16 %v740, %v739
        %v750 = vpack.c.b16 %v742, %v741
        %v752 = vsel %vm448, %v743, 0
        %v755 = vsel %vm448, %v744, 0
        %v758 = vsel %vm448, %v745, 0
        %v761 = vsel %vm448, %v746, 0
        %v764 = vsel %vm448, %v747, 0
        %v767 = vsel %vm448, %v748, 0
        %v770 = vsel %vm448, %v749, 0
        %v773 = vsel %vm448, %v750, 0
        %v776 = vsel %vm473, %v726, 0
        %778 = vmatpush.bf16.msra.mxu0 0
        %779 = vmatpush.bf16.msra.mxu0 0
        %780 = vmatpush.bf16.msra.mxu0 0
        %781 = vmatpush.bf16.msra.mxu0 0
        %782 = vmatpush.bf16.msra.mxu0 0
        %783 = vmatpush.bf16.msra.mxu0 0
        %784 = vmatpush.bf16.msra.mxu0 0
        %785 = vmatpush.bf16.msra.mxu0 %v776
        %786 = vmatmul.bf16.gmra.mxu0 %v752
        %v787 = vpop.f32.mrf.mxu0
        %v788 = vadd.f32 0.0, %v787
        %v789 = vpop.f32.mrf.mxu0
        %v790 = vadd.f32 0.0, %v789
        %791 = vmatmul.bf16.gmra.mxu0 %v755
        %v792 = vpop.f32.mrf.mxu0
        %v793 = vadd.f32 0.0, %v792
        %v794 = vpop.f32.mrf.mxu0
        %v795 = vadd.f32 0.0, %v794
        %796 = vmatmul.bf16.gmra.mxu0 %v758
        %v797 = vpop.f32.mrf.mxu0
        %v798 = vadd.f32 0.0, %v797
        %v799 = vpop.f32.mrf.mxu0
        %v800 = vadd.f32 0.0, %v799
        %801 = vmatmul.bf16.gmra.mxu0 %v761
        %v802 = vpop.f32.mrf.mxu0
        %v803 = vadd.f32 0.0, %v802
        %v804 = vpop.f32.mrf.mxu0
        %v805 = vadd.f32 0.0, %v804
        %806 = vmatmul.bf16.gmra.mxu0 %v764
        %v807 = vpop.f32.mrf.mxu0
        %v808 = vadd.f32 0.0, %v807
        %v809 = vpop.f32.mrf.mxu0
        %v810 = vadd.f32 0.0, %v809
        %811 = vmatmul.bf16.gmra.mxu0 %v767
        %v812 = vpop.f32.mrf.mxu0
        %v813 = vadd.f32 0.0, %v812
        %v814 = vpop.f32.mrf.mxu0
        %v815 = vadd.f32 0.0, %v814
        %816 = vmatmul.bf16.gmra.mxu0 %v770
        %v817 = vpop.f32.mrf.mxu0
        %v818 = vadd.f32 0.0, %v817
        %v819 = vpop.f32.mrf.mxu0
        %v820 = vadd.f32 0.0, %v819
        %821 = vmatmul.bf16.gmra.mxu0 %v773
        %v822 = vpop.f32.mrf.mxu0
        %v823 = vadd.f32 0.0, %v822
        %v824 = vpop.f32.mrf.mxu0
        %v825 = vadd.f32 0.0, %v824
        %826 = vdwg.mxu0
        %v827 = vadd.f32 %v603, %v788
        %v828 = vadd.f32 %v605, %v790
        %v829 = vadd.f32 %v608, %v793
        %v830 = vadd.f32 %v610, %v795
        %v831 = vadd.f32 %v613, %v798
        %v832 = vadd.f32 %v615, %v800
        %v833 = vadd.f32 %v618, %v803
        %v834 = vadd.f32 %v620, %v805
        %v835 = vadd.f32 %v623, %v808
        %v836 = vadd.f32 %v625, %v810
        %v837 = vadd.f32 %v628, %v813
        %v838 = vadd.f32 %v630, %v815
        %v839 = vadd.f32 %v633, %v818
        %v840 = vadd.f32 %v635, %v820
        %v841 = vadd.f32 %v638, %v823
        %v842 = vadd.f32 %v640, %v825
        %s843 = sadd.s32 %s198, 1
        %s844 = smul.u32 %s843, 3
        %s845 = smul.addr %s844, 4
        %s846 = scalar_lea.vmem %s195, %s845
        %v847 = vld [vmem:[%s846] sm:$0xf]
        %v848 = vld [vmem:[%s846 + $0x4] sm:$0xf]
        %v849 = vld [vmem:[%s846 + $0xc] sm:$0xf]
        %v850 = vld [vmem:[%s846 + $0x10] sm:$0xf]
        %v851 = vld [vmem:[%s846 + $0x18] sm:$0xf]
        %v852 = vld [vmem:[%s846 + $0x1c] sm:$0xf]
        %v853 = vld [vmem:[%s846 + $0x24] sm:$0xf]
        %v854 = vld [vmem:[%s846 + $0x28] sm:$0xf]
        %v855 = vld [vmem:[%s846 + $0x30] sm:$0xf]
        %v856 = vld [vmem:[%s846 + $0x34] sm:$0xf]
        %v857 = vld [vmem:[%s846 + $0x3c] sm:$0xf]
        %v858 = vld [vmem:[%s846 + $0x40] sm:$0xf]
        %v859 = vld [vmem:[%s846 + $0x48] sm:$0xf]
        %v860 = vld [vmem:[%s846 + $0x4c] sm:$0xf]
        %v861 = vld [vmem:[%s846 + $0x54] sm:$0xf]
        %v862 = vld [vmem:[%s846 + $0x58] sm:$0xf]
        %s863 = scalar_lea.vmem %s1, 6
        %v864 = vld [vmem:[%s863] sm:$0x3]
        %v881 = vunpack.c.l.b16 %v847
        %v882 = vunpack.c.l.b16 %v848
        %v883 = vunpack.c.l.b16 %v849
        %v884 = vunpack.c.l.b16 %v850
        %v885 = vunpack.c.l.b16 %v851
        %v886 = vunpack.c.l.b16 %v852
        %v887 = vunpack.c.l.b16 %v853
        %v888 = vunpack.c.l.b16 %v854
        %v889 = vunpack.c.l.b16 %v855
        %v890 = vunpack.c.l.b16 %v856
        %v891 = vunpack.c.l.b16 %v857
        %v892 = vunpack.c.l.b16 %v858
        %v893 = vunpack.c.l.b16 %v859
        %v894 = vunpack.c.l.b16 %v860
        %v895 = vunpack.c.l.b16 %v861
        %v896 = vunpack.c.l.b16 %v862
        %v897 = vpack.c.b16 %v882, %v881
        %v898 = vpack.c.b16 %v884, %v883
        %v899 = vpack.c.b16 %v886, %v885
        %v900 = vpack.c.b16 %v888, %v887
        %v901 = vpack.c.b16 %v890, %v889
        %v902 = vpack.c.b16 %v892, %v891
        %v903 = vpack.c.b16 %v894, %v893
        %v904 = vpack.c.b16 %v896, %v895
        %v906 = vsel %vm448, %v897, 0
        %v909 = vsel %vm448, %v898, 0
        %v912 = vsel %vm448, %v899, 0
        %v915 = vsel %vm448, %v900, 0
        %v918 = vsel %vm448, %v901, 0
        %v921 = vsel %vm448, %v902, 0
        %v924 = vsel %vm448, %v903, 0
        %v927 = vsel %vm448, %v904, 0
        %v930 = vsel %vm473, %v864, 0
        %932 = vmatpush.bf16.msra.mxu0 0
        %933 = vmatpush.bf16.msra.mxu0 0
        %934 = vmatpush.bf16.msra.mxu0 0
        %935 = vmatpush.bf16.msra.mxu0 0
        %936 = vmatpush.bf16.msra.mxu0 0
        %937 = vmatpush.bf16.msra.mxu0 0
        %938 = vmatpush.bf16.msra.mxu0 0
        %939 = vmatpush.bf16.msra.mxu0 %v930
        %940 = vmatmul.bf16.gmra.mxu0 %v906
        %v941 = vpop.f32.mrf.mxu0
        %v942 = vadd.f32 0.0, %v941
        %v943 = vpop.f32.mrf.mxu0
        %v944 = vadd.f32 0.0, %v943
        %945 = vmatmul.bf16.gmra.mxu0 %v909
        %v946 = vpop.f32.mrf.mxu0
        %v947 = vadd.f32 0.0, %v946
        %v948 = vpop.f32.mrf.mxu0
        %v949 = vadd.f32 0.0, %v948
        %950 = vmatmul.bf16.gmra.mxu0 %v912
        %v951 = vpop.f32.mrf.mxu0
        %v952 = vadd.f32 0.0, %v951
        %v953 = vpop.f32.mrf.mxu0
        %v954 = vadd.f32 0.0, %v953
        %955 = vmatmul.bf16.gmra.mxu0 %v915
        %v956 = vpop.f32.mrf.mxu0
        %v957 = vadd.f32 0.0, %v956
        %v958 = vpop.f32.mrf.mxu0
        %v959 = vadd.f32 0.0, %v958
        %960 = vmatmul.bf16.gmra.mxu0 %v918
        %v961 = vpop.f32.mrf.mxu0
        %v962 = vadd.f32 0.0, %v961
        %v963 = vpop.f32.mrf.mxu0
        %v964 = vadd.f32 0.0, %v963
        %965 = vmatmul.bf16.gmra.mxu0 %v921
        %v966 = vpop.f32.mrf.mxu0
        %v967 = vadd.f32 0.0, %v966
        %v968 = vpop.f32.mrf.mxu0
        %v969 = vadd.f32 0.0, %v968
        %970 = vmatmul.bf16.gmra.mxu0 %v924
        %v971 = vpop.f32.mrf.mxu0
        %v972 = vadd.f32 0.0, %v971
        %v973 = vpop.f32.mrf.mxu0
        %v974 = vadd.f32 0.0, %v973
        %975 = vmatmul.bf16.gmra.mxu0 %v927
        %v976 = vpop.f32.mrf.mxu0
        %v977 = vadd.f32 0.0, %v976
        %v978 = vpop.f32.mrf.mxu0
        %v979 = vadd.f32 0.0, %v978
        %980 = vdwg.mxu0
        %v981 = vadd.f32 %v827, %v942
        %v982 = vadd.f32 %v828, %v944
        %v983 = vadd.f32 %v829, %v947
        %v984 = vadd.f32 %v830, %v949
        %v985 = vadd.f32 %v831, %v952
        %v986 = vadd.f32 %v832, %v954
        %v987 = vadd.f32 %v833, %v957
        %v988 = vadd.f32 %v834, %v959
        %v989 = vadd.f32 %v835, %v962
        %v990 = vadd.f32 %v836, %v964
        %v991 = vadd.f32 %v837, %v967
        %v992 = vadd.f32 %v838, %v969
        %v993 = vadd.f32 %v839, %v972
        %v994 = vadd.f32 %v840, %v974
        %v995 = vadd.f32 %v841, %v977
        %v996 = vadd.f32 %v842, %v979
        %v997 = vld [vmem:[%s846] sm:$0xf]
        %v998 = vld [vmem:[%s846 + $0x4] sm:$0xf]
        %v999 = vld [vmem:[%s846 + $0x8] sm:$0x1]
        %v1000 = vld [vmem:[%s846 + $0xc] sm:$0xf]
        %v1001 = vld [vmem:[%s846 + $0x10] sm:$0xf]
        %v1002 = vld [vmem:[%s846 + $0x14] sm:$0x1]
        %v1003 = vld [vmem:[%s846 + $0x18] sm:$0xf]
        %v1004 = vld [vmem:[%s846 + $0x1c] sm:$0xf]
        %v1005 = vld [vmem:[%s846 + $0x20] sm:$0x1]
        %v1006 = vld [vmem:[%s846 + $0x24] sm:$0xf]
        %v1007 = vld [vmem:[%s846 + $0x28] sm:$0xf]
        %v1008 = vld [vmem:[%s846 + $0x2c] sm:$0x1]
        %v1009 = vld [vmem:[%s846 + $0x30] sm:$0xf]
        %v1010 = vld [vmem:[%s846 + $0x34] sm:$0xf]
        %v1011 = vld [vmem:[%s846 + $0x38] sm:$0x1]
        %v1012 = vld [vmem:[%s846 + $0x3c] sm:$0xf]
        %v1013 = vld [vmem:[%s846 + $0x40] sm:$0xf]
        %v1014 = vld [vmem:[%s846 + $0x44] sm:$0x1]
        %v1015 = vld [vmem:[%s846 + $0x48] sm:$0xf]
        %v1016 = vld [vmem:[%s846 + $0x4c] sm:$0xf]
        %v1017 = vld [vmem:[%s846 + $0x50] sm:$0x1]
        %v1018 = vld [vmem:[%s846 + $0x54] sm:$0xf]
        %v1019 = vld [vmem:[%s846 + $0x58] sm:$0xf]
        %v1020 = vld [vmem:[%s846 + $0x5c] sm:$0x1]
        %v1022 = vshrl.u32 %v997, 16
        %v1024 = vrot.slane %v1022, 4
        %v1025 = vshll.u32 %v997, 16
        %v1027 = vrot.slane %v1025, 5
        %v1028 = vor.u32 %v1024, %v1027
        %v1029 = vrot.slane %v1028, 4
        %v1031 = vshll.u32 %v998, 16
        %v1033 = vrot.slane %v1031, 5
        %v1034 = vsel %vm229, %v1029, %v1033
        %v1035 = vshrl.u32 %v998, 16
        %v1037 = vrot.slane %v1035, 4
        %v1038 = vor.u32 %v1037, %v1033
        %v1039 = vrot.slane %v1038, 4
        %v1041 = vshll.u32 %v999, 16
        %v1043 = vrot.slane %v1041, 5
        %v1044 = vsel %vm229, %v1039, %v1043
        %v1046 = vshrl.u32 %v1000, 16
        %v1048 = vrot.slane %v1046, 4
        %v1049 = vshll.u32 %v1000, 16
        %v1051 = vrot.slane %v1049, 5
        %v1052 = vor.u32 %v1048, %v1051
        %v1053 = vrot.slane %v1052, 4
        %v1055 = vshll.u32 %v1001, 16
        %v1057 = vrot.slane %v1055, 5
        %v1058 = vsel %vm229, %v1053, %v1057
        %v1059 = vshrl.u32 %v1001, 16
        %v1061 = vrot.slane %v1059, 4
        %v1062 = vor.u32 %v1061, %v1057
        %v1063 = vrot.slane %v1062, 4
        %v1065 = vshll.u32 %v1002, 16
        %v1067 = vrot.slane %v1065, 5
        %v1068 = vsel %vm229, %v1063, %v1067
        %v1070 = vshrl.u32 %v1003, 16
        %v1072 = vrot.slane %v1070, 4
        %v1073 = vshll.u32 %v1003, 16
        %v1075 = vrot.slane %v1073, 5
        %v1076 = vor.u32 %v1072, %v1075
        %v1077 = vrot.slane %v1076, 4
        %v1079 = vshll.u32 %v1004, 16
        %v1081 = vrot.slane %v1079, 5
        %v1082 = vsel %vm229, %v1077, %v1081
        %v1083 = vshrl.u32 %v1004, 16
        %v1085 = vrot.slane %v1083, 4
        %v1086 = vor.u32 %v1085, %v1081
        %v1087 = vrot.slane %v1086, 4
        %v1089 = vshll.u32 %v1005, 16
        %v1091 = vrot.slane %v1089, 5
        %v1092 = vsel %vm229, %v1087, %v1091
        %v1094 = vshrl.u32 %v1006, 16
        %v1096 = vrot.slane %v1094, 4
        %v1097 = vshll.u32 %v1006, 16
        %v1099 = vrot.slane %v1097, 5
        %v1100 = vor.u32 %v1096, %v1099
        %v1101 = vrot.slane %v1100, 4
        %v1103 = vshll.u32 %v1007, 16
        %v1105 = vrot.slane %v1103, 5
        %v1106 = vsel %vm229, %v1101, %v1105
        %v1107 = vshrl.u32 %v1007, 16
        %v1109 = vrot.slane %v1107, 4
        %v1110 = vor.u32 %v1109, %v1105
        %v1111 = vrot.slane %v1110, 4
        %v1113 = vshll.u32 %v1008, 16
        %v1115 = vrot.slane %v1113, 5
        %v1116 = vsel %vm229, %v1111, %v1115
        %v1118 = vshrl.u32 %v1009, 16
        %v1120 = vrot.slane %v1118, 4
        %v1121 = vshll.u32 %v1009, 16
        %v1123 = vrot.slane %v1121, 5
        %v1124 = vor.u32 %v1120, %v1123
        %v1125 = vrot.slane %v1124, 4
        %v1127 = vshll.u32 %v1010, 16
        %v1129 = vrot.slane %v1127, 5
        %v1130 = vsel %vm229, %v1125, %v1129
        %v1131 = vshrl.u32 %v1010, 16
        %v1133 = vrot.slane %v1131, 4
        %v1134 = vor.u32 %v1133, %v1129
        %v1135 = vrot.slane %v1134, 4
        %v1137 = vshll.u32 %v1011, 16
        %v1139 = vrot.slane %v1137, 5
        %v1140 = vsel %vm229, %v1135, %v1139
        %v1142 = vshrl.u32 %v1012, 16
        %v1144 = vrot.slane %v1142, 4
        %v1145 = vshll.u32 %v1012, 16
        %v1147 = vrot.slane %v1145, 5
        %v1148 = vor.u32 %v1144, %v1147
        %v1149 = vrot.slane %v1148, 4
        %v1151 = vshll.u32 %v1013, 16
        %v1153 = vrot.slane %v1151, 5
        %v1154 = vsel %vm229, %v1149, %v1153
        %v1155 = vshrl.u32 %v1013, 16
        %v1157 = vrot.slane %v1155, 4
        %v1158 = vor.u32 %v1157, %v1153
        %v1159 = vrot.slane %v1158, 4
        %v1161 = vshll.u32 %v1014, 16
        %v1163 = vrot.slane %v1161, 5
        %v1164 = vsel %vm229, %v1159, %v1163
        %v1166 = vshrl.u32 %v1015, 16
        %v1168 = vrot.slane %v1166, 4
        %v1169 = vshll.u32 %v1015, 16
        %v1171 = vrot.slane %v1169, 5
        %v1172 = vor.u32 %v1168, %v1171
        %v1173 = vrot.slane %v1172, 4
        %v1175 = vshll.u32 %v1016, 16
        %v1177 = vrot.slane %v1175, 5
        %v1178 = vsel %vm229, %v1173, %v1177
        %v1179 = vshrl.u32 %v1016, 16
        %v1181 = vrot.slane %v1179, 4
        %v1182 = vor.u32 %v1181, %v1177
        %v1183 = vrot.slane %v1182, 4
        %v1185 = vshll.u32 %v1017, 16
        %v1187 = vrot.slane %v1185, 5
        %v1188 = vsel %vm229, %v1183, %v1187
        %v1190 = vshrl.u32 %v1018, 16
        %v1192 = vrot.slane %v1190, 4
        %v1193 = vshll.u32 %v1018, 16
        %v1195 = vrot.slane %v1193, 5
        %v1196 = vor.u32 %v1192, %v1195
        %v1197 = vrot.slane %v1196, 4
        %v1199 = vshll.u32 %v1019, 16
        %v1201 = vrot.slane %v1199, 5
        %v1202 = vsel %vm229, %v1197, %v1201
        %v1203 = vshrl.u32 %v1019, 16
        %v1205 = vrot.slane %v1203, 4
        %v1206 = vor.u32 %v1205, %v1201
        %v1207 = vrot.slane %v1206, 4
        %v1209 = vshll.u32 %v1020, 16
        %v1211 = vrot.slane %v1209, 5
        %v1212 = vsel %vm229, %v1207, %v1211
        %s1213 = scalar_lea.vmem %s1, 8
        %v1214 = vld [vmem:[%s1213] sm:$0x3]
        %v1215 = vunpack.c.l.b16 %v1034
        %v1216 = vunpack.c.l.b16 %v1044
        %v1217 = vunpack.c.l.b16 %v1058
        %v1218 = vunpack.c.l.b16 %v1068
        %v1219 = vunpack.c.l.b16 %v1082
        %v1220 = vunpack.c.l.b16 %v1092
        %v1221 = vunpack.c.l.b16 %v1106
        %v1222 = vunpack.c.l.b16 %v1116
        %v1223 = vunpack.c.l.b16 %v1130
        %v1224 = vunpack.c.l.b16 %v1140
        %v1225 = vunpack.c.l.b16 %v1154
        %v1226 = vunpack.c.l.b16 %v1164
        %v1227 = vunpack.c.l.b16 %v1178
        %v1228 = vunpack.c.l.b16 %v1188
        %v1229 = vunpack.c.l.b16 %v1202
        %v1230 = vunpack.c.l.b16 %v1212
        %v1231 = vpack.c.b16 %v1216, %v1215
        %v1232 = vpack.c.b16 %v1218, %v1217
        %v1233 = vpack.c.b16 %v1220, %v1219
        %v1234 = vpack.c.b16 %v1222, %v1221
        %v1235 = vpack.c.b16 %v1224, %v1223
        %v1236 = vpack.c.b16 %v1226, %v1225
        %v1237 = vpack.c.b16 %v1228, %v1227
        %v1238 = vpack.c.b16 %v1230, %v1229
        %v1240 = vsel %vm448, %v1231, 0
        %v1243 = vsel %vm448, %v1232, 0
        %v1246 = vsel %vm448, %v1233, 0
        %v1249 = vsel %vm448, %v1234, 0
        %v1252 = vsel %vm448, %v1235, 0
        %v1255 = vsel %vm448, %v1236, 0
        %v1258 = vsel %vm448, %v1237, 0
        %v1261 = vsel %vm448, %v1238, 0
        %v1264 = vsel %vm473, %v1214, 0
        %1266 = vmatpush.bf16.msra.mxu0 0
        %1267 = vmatpush.bf16.msra.mxu0 0
        %1268 = vmatpush.bf16.msra.mxu0 0
        %1269 = vmatpush.bf16.msra.mxu0 0
        %1270 = vmatpush.bf16.msra.mxu0 0
        %1271 = vmatpush.bf16.msra.mxu0 0
        %1272 = vmatpush.bf16.msra.mxu0 0
        %1273 = vmatpush.bf16.msra.mxu0 %v1264
        %1274 = vmatmul.bf16.gmra.mxu0 %v1240
        %v1275 = vpop.f32.mrf.mxu0
        %v1276 = vadd.f32 0.0, %v1275
        %v1277 = vpop.f32.mrf.mxu0
        %v1278 = vadd.f32 0.0, %v1277
        %1279 = vmatmul.bf16.gmra.mxu0 %v1243
        %v1280 = vpop.f32.mrf.mxu0
        %v1281 = vadd.f32 0.0, %v1280
        %v1282 = vpop.f32.mrf.mxu0
        %v1283 = vadd.f32 0.0, %v1282
        %1284 = vmatmul.bf16.gmra.mxu0 %v1246
        %v1285 = vpop.f32.mrf.mxu0
        %v1286 = vadd.f32 0.0, %v1285
        %v1287 = vpop.f32.mrf.mxu0
        %v1288 = vadd.f32 0.0, %v1287
        %1289 = vmatmul.bf16.gmra.mxu0 %v1249
        %v1290 = vpop.f32.mrf.mxu0
        %v1291 = vadd.f32 0.0, %v1290
        %v1292 = vpop.f32.mrf.mxu0
        %v1293 = vadd.f32 0.0, %v1292
        %1294 = vmatmul.bf16.gmra.mxu0 %v1252
        %v1295 = vpop.f32.mrf.mxu0
        %v1296 = vadd.f32 0.0, %v1295
        %v1297 = vpop.f32.mrf.mxu0
        %v1298 = vadd.f32 0.0, %v1297
        %1299 = vmatmul.bf16.gmra.mxu0 %v1255
        %v1300 = vpop.f32.mrf.mxu0
        %v1301 = vadd.f32 0.0, %v1300
        %v1302 = vpop.f32.mrf.mxu0
        %v1303 = vadd.f32 0.0, %v1302
        %1304 = vmatmul.bf16.gmra.mxu0 %v1258
        %v1305 = vpop.f32.mrf.mxu0
        %v1306 = vadd.f32 0.0, %v1305
        %v1307 = vpop.f32.mrf.mxu0
        %v1308 = vadd.f32 0.0, %v1307
        %1309 = vmatmul.bf16.gmra.mxu0 %v1261
        %v1310 = vpop.f32.mrf.mxu0
        %v1311 = vadd.f32 0.0, %v1310
        %v1312 = vpop.f32.mrf.mxu0
        %v1313 = vadd.f32 0.0, %v1312
        %1314 = vdwg.mxu0
        %v1315 = vadd.f32 %v981, %v1276
        %v1316 = vadd.f32 %v982, %v1278
        %v1317 = vadd.f32 %v983, %v1281
        %v1318 = vadd.f32 %v984, %v1283
        %v1319 = vadd.f32 %v985, %v1286
        %v1320 = vadd.f32 %v986, %v1288
        %v1321 = vadd.f32 %v987, %v1291
        %v1322 = vadd.f32 %v988, %v1293
        %v1323 = vadd.f32 %v989, %v1296
        %v1324 = vadd.f32 %v990, %v1298
        %v1325 = vadd.f32 %v991, %v1301
        %v1326 = vadd.f32 %v992, %v1303
        %v1327 = vadd.f32 %v993, %v1306
        %v1328 = vadd.f32 %v994, %v1308
        %v1329 = vadd.f32 %v995, %v1311
        %v1330 = vadd.f32 %v996, %v1313
        %v1331 = vld [vmem:[%s846] sm:$0xe]
        %v1332 = vld [vmem:[%s846 + $0xc] sm:$0xe]
        %v1333 = vld [vmem:[%s846 + $0x18] sm:$0xe]
        %v1334 = vld [vmem:[%s846 + $0x24] sm:$0xe]
        %v1335 = vld [vmem:[%s846 + $0x30] sm:$0xe]
        %v1336 = vld [vmem:[%s846 + $0x3c] sm:$0xe]
        %v1337 = vld [vmem:[%s846 + $0x48] sm:$0xe]
        %v1338 = vld [vmem:[%s846 + $0x54] sm:$0xe]
        %v1363 = vrot.slane %v1331, 5
        %v1364 = vrot.slane %v1363, 4
        %v1365 = vrot.slane %v998, 5
        %v1366 = vsel %vm668, %v1364, %v1365
        %v1367 = vrot.slane %v1365, 4
        %v1368 = vrot.slane %v999, 5
        %v1369 = vsel %vm668, %v1367, %v1368
        %v1370 = vrot.slane %v1332, 5
        %v1371 = vrot.slane %v1370, 4
        %v1372 = vrot.slane %v1001, 5
        %v1373 = vsel %vm668, %v1371, %v1372
        %v1374 = vrot.slane %v1372, 4
        %v1375 = vrot.slane %v1002, 5
        %v1376 = vsel %vm668, %v1374, %v1375
        %v1377 = vrot.slane %v1333, 5
        %v1378 = vrot.slane %v1377, 4
        %v1379 = vrot.slane %v1004, 5
        %v1380 = vsel %vm668, %v1378, %v1379
        %v1381 = vrot.slane %v1379, 4
        %v1382 = vrot.slane %v1005, 5
        %v1383 = vsel %vm668, %v1381, %v1382
        %v1384 = vrot.slane %v1334, 5
        %v1385 = vrot.slane %v1384, 4
        %v1386 = vrot.slane %v1007, 5
        %v1387 = vsel %vm668, %v1385, %v1386
        %v1388 = vrot.slane %v1386, 4
        %v1389 = vrot.slane %v1008, 5
        %v1390 = vsel %vm668, %v1388, %v1389
        %v1391 = vrot.slane %v1335, 5
        %v1392 = vrot.slane %v1391, 4
        %v1393 = vrot.slane %v1010, 5
        %v1394 = vsel %vm668, %v1392, %v1393
        %v1395 = vrot.slane %v1393, 4
        %v1396 = vrot.slane %v1011, 5
        %v1397 = vsel %vm668, %v1395, %v1396
        %v1398 = vrot.slane %v1336, 5
        %v1399 = vrot.slane %v1398, 4
        %v1400 = vrot.slane %v1013, 5
        %v1401 = vsel %vm668, %v1399, %v1400
        %v1402 = vrot.slane %v1400, 4
        %v1403 = vrot.slane %v1014, 5
        %v1404 = vsel %vm668, %v1402, %v1403
        %v1405 = vrot.slane %v1337, 5
        %v1406 = vrot.slane %v1405, 4
        %v1407 = vrot.slane %v1016, 5
        %v1408 = vsel %vm668, %v1406, %v1407
        %v1409 = vrot.slane %v1407, 4
        %v1410 = vrot.slane %v1017, 5
        %v1411 = vsel %vm668, %v1409, %v1410
        %v1412 = vrot.slane %v1338, 5
        %v1413 = vrot.slane %v1412, 4
        %v1414 = vrot.slane %v1019, 5
        %v1415 = vsel %vm668, %v1413, %v1414
        %v1416 = vrot.slane %v1414, 4
        %v1417 = vrot.slane %v1020, 5
        %v1418 = vsel %vm668, %v1416, %v1417
        %s1419 = scalar_lea.vmem %s1, 10
        %v1420 = vld [vmem:[%s1419] sm:$0x3]
        %v1421 = vunpack.c.l.b16 %v1366
        %v1422 = vunpack.c.l.b16 %v1369
        %v1423 = vunpack.c.l.b16 %v1373
        %v1424 = vunpack.c.l.b16 %v1376
        %v1425 = vunpack.c.l.b16 %v1380
        %v1426 = vunpack.c.l.b16 %v1383
        %v1427 = vunpack.c.l.b16 %v1387
        %v1428 = vunpack.c.l.b16 %v1390
        %v1429 = vunpack.c.l.b16 %v1394
        %v1430 = vunpack.c.l.b16 %v1397
        %v1431 = vunpack.c.l.b16 %v1401
        %v1432 = vunpack.c.l.b16 %v1404
        %v1433 = vunpack.c.l.b16 %v1408
        %v1434 = vunpack.c.l.b16 %v1411
        %v1435 = vunpack.c.l.b16 %v1415
        %v1436 = vunpack.c.l.b16 %v1418
        %v1437 = vpack.c.b16 %v1422, %v1421
        %v1438 = vpack.c.b16 %v1424, %v1423
        %v1439 = vpack.c.b16 %v1426, %v1425
        %v1440 = vpack.c.b16 %v1428, %v1427
        %v1441 = vpack.c.b16 %v1430, %v1429
        %v1442 = vpack.c.b16 %v1432, %v1431
        %v1443 = vpack.c.b16 %v1434, %v1433
        %v1444 = vpack.c.b16 %v1436, %v1435
        %v1446 = vsel %vm448, %v1437, 0
        %v1449 = vsel %vm448, %v1438, 0
        %v1452 = vsel %vm448, %v1439, 0
        %v1455 = vsel %vm448, %v1440, 0
        %v1458 = vsel %vm448, %v1441, 0
        %v1461 = vsel %vm448, %v1442, 0
        %v1464 = vsel %vm448, %v1443, 0
        %v1467 = vsel %vm448, %v1444, 0
        %v1470 = vsel %vm473, %v1420, 0
        %1472 = vmatpush.bf16.msra.mxu0 0
        %1473 = vmatpush.bf16.msra.mxu0 0
        %1474 = vmatpush.bf16.msra.mxu0 0
        %1475 = vmatpush.bf16.msra.mxu0 0
        %1476 = vmatpush.bf16.msra.mxu0 0
        %1477 = vmatpush.bf16.msra.mxu0 0
        %1478 = vmatpush.bf16.msra.mxu0 0
        %1479 = vmatpush.bf16.msra.mxu0 %v1470
        %1480 = vmatmul.bf16.gmra.mxu0 %v1446
        %v1481 = vpop.f32.mrf.mxu0
        %v1482 = vadd.f32 0.0, %v1481
        %v1483 = vpop.f32.mrf.mxu0
        %v1484 = vadd.f32 0.0, %v1483
        %1485 = vmatmul.bf16.gmra.mxu0 %v1449
        %v1486 = vpop.f32.mrf.mxu0
        %v1487 = vadd.f32 0.0, %v1486
        %v1488 = vpop.f32.mrf.mxu0
        %v1489 = vadd.f32 0.0, %v1488
        %1490 = vmatmul.bf16.gmra.mxu0 %v1452
        %v1491 = vpop.f32.mrf.mxu0
        %v1492 = vadd.f32 0.0, %v1491
        %v1493 = vpop.f32.mrf.mxu0
        %v1494 = vadd.f32 0.0, %v1493
        %1495 = vmatmul.bf16.gmra.mxu0 %v1455
        %v1496 = vpop.f32.mrf.mxu0
        %v1497 = vadd.f32 0.0, %v1496
        %v1498 = vpop.f32.mrf.mxu0
        %v1499 = vadd.f32 0.0, %v1498
        %1500 = vmatmul.bf16.gmra.mxu0 %v1458
        %v1501 = vpop.f32.mrf.mxu0
        %v1502 = vadd.f32 0.0, %v1501
        %v1503 = vpop.f32.mrf.mxu0
        %v1504 = vadd.f32 0.0, %v1503
        %1505 = vmatmul.bf16.gmra.mxu0 %v1461
        %v1506 = vpop.f32.mrf.mxu0
        %v1507 = vadd.f32 0.0, %v1506
        %v1508 = vpop.f32.mrf.mxu0
        %v1509 = vadd.f32 0.0, %v1508
        %1510 = vmatmul.bf16.gmra.mxu0 %v1464
        %v1511 = vpop.f32.mrf.mxu0
        %v1512 = vadd.f32 0.0, %v1511
        %v1513 = vpop.f32.mrf.mxu0
        %v1514 = vadd.f32 0.0, %v1513
        %1515 = vmatmul.bf16.gmra.mxu0 %v1467
        %v1516 = vpop.f32.mrf.mxu0
        %v1517 = vadd.f32 0.0, %v1516
        %v1518 = vpop.f32.mrf.mxu0
        %v1519 = vadd.f32 0.0, %v1518
        %1520 = vdwg.mxu0
        %v1521 = vadd.f32 %v1315, %v1482
        %v1522 = vadd.f32 %v1316, %v1484
        %v1523 = vadd.f32 %v1317, %v1487
        %v1524 = vadd.f32 %v1318, %v1489
        %v1525 = vadd.f32 %v1319, %v1492
        %v1526 = vadd.f32 %v1320, %v1494
        %v1527 = vadd.f32 %v1321, %v1497
        %v1528 = vadd.f32 %v1322, %v1499
        %v1529 = vadd.f32 %v1323, %v1502
        %v1530 = vadd.f32 %v1324, %v1504
        %v1531 = vadd.f32 %v1325, %v1507
        %v1532 = vadd.f32 %v1326, %v1509
        %v1533 = vadd.f32 %v1327, %v1512
        %v1534 = vadd.f32 %v1328, %v1514
        %v1535 = vadd.f32 %v1329, %v1517
        %v1536 = vadd.f32 %v1330, %v1519
        %s1537 = sadd.s32 %s198, 2
        %s1538 = smul.u32 %s1537, 3
        %s1539 = smul.addr %s1538, 4
        %s1540 = scalar_lea.vmem %s195, %s1539
        %v1541 = vld [vmem:[%s1540] sm:$0xf]
        %v1542 = vld [vmem:[%s1540 + $0x4] sm:$0xf]
        %v1543 = vld [vmem:[%s1540 + $0xc] sm:$0xf]
        %v1544 = vld [vmem:[%s1540 + $0x10] sm:$0xf]
        %v1545 = vld [vmem:[%s1540 + $0x18] sm:$0xf]
        %v1546 = vld [vmem:[%s1540 + $0x1c] sm:$0xf]
        %v1547 = vld [vmem:[%s1540 + $0x24] sm:$0xf]
        %v1548 = vld [vmem:[%s1540 + $0x28] sm:$0xf]
        %v1549 = vld [vmem:[%s1540 + $0x30] sm:$0xf]
        %v1550 = vld [vmem:[%s1540 + $0x34] sm:$0xf]
        %v1551 = vld [vmem:[%s1540 + $0x3c] sm:$0xf]
        %v1552 = vld [vmem:[%s1540 + $0x40] sm:$0xf]
        %v1553 = vld [vmem:[%s1540 + $0x48] sm:$0xf]
        %v1554 = vld [vmem:[%s1540 + $0x4c] sm:$0xf]
        %v1555 = vld [vmem:[%s1540 + $0x54] sm:$0xf]
        %v1556 = vld [vmem:[%s1540 + $0x58] sm:$0xf]
        %s1557 = scalar_lea.vmem %s1, 12
        %v1558 = vld [vmem:[%s1557] sm:$0x3]
        %v1575 = vunpack.c.l.b16 %v1541
        %v1576 = vunpack.c.l.b16 %v1542
        %v1577 = vunpack.c.l.b16 %v1543
        %v1578 = vunpack.c.l.b16 %v1544
        %v1579 = vunpack.c.l.b16 %v1545
        %v1580 = vunpack.c.l.b16 %v1546
        %v1581 = vunpack.c.l.b16 %v1547
        %v1582 = vunpack.c.l.b16 %v1548
        %v1583 = vunpack.c.l.b16 %v1549
        %v1584 = vunpack.c.l.b16 %v1550
        %v1585 = vunpack.c.l.b16 %v1551
        %v1586 = vunpack.c.l.b16 %v1552
        %v1587 = vunpack.c.l.b16 %v1553
        %v1588 = vunpack.c.l.b16 %v1554
        %v1589 = vunpack.c.l.b16 %v1555
        %v1590 = vunpack.c.l.b16 %v1556
        %v1591 = vpack.c.b16 %v1576, %v1575
        %v1592 = vpack.c.b16 %v1578, %v1577
        %v1593 = vpack.c.b16 %v1580, %v1579
        %v1594 = vpack.c.b16 %v1582, %v1581
        %v1595 = vpack.c.b16 %v1584, %v1583
        %v1596 = vpack.c.b16 %v1586, %v1585
        %v1597 = vpack.c.b16 %v1588, %v1587
        %v1598 = vpack.c.b16 %v1590, %v1589
        %v1600 = vsel %vm448, %v1591, 0
        %v1603 = vsel %vm448, %v1592, 0
        %v1606 = vsel %vm448, %v1593, 0
        %v1609 = vsel %vm448, %v1594, 0
        %v1612 = vsel %vm448, %v1595, 0
        %v1615 = vsel %vm448, %v1596, 0
        %v1618 = vsel %vm448, %v1597, 0
        %v1621 = vsel %vm448, %v1598, 0
        %v1624 = vsel %vm473, %v1558, 0
        %1626 = vmatpush.bf16.msra.mxu0 0
        %1627 = vmatpush.bf16.msra.mxu0 0
        %1628 = vmatpush.bf16.msra.mxu0 0
        %1629 = vmatpush.bf16.msra.mxu0 0
        %1630 = vmatpush.bf16.msra.mxu0 0
        %1631 = vmatpush.bf16.msra.mxu0 0
        %1632 = vmatpush.bf16.msra.mxu0 0
        %1633 = vmatpush.bf16.msra.mxu0 %v1624
        %1634 = vmatmul.bf16.gmra.mxu0 %v1600
        %v1635 = vpop.f32.mrf.mxu0
        %v1636 = vadd.f32 0.0, %v1635
        %v1637 = vpop.f32.mrf.mxu0
        %v1638 = vadd.f32 0.0, %v1637
        %1639 = vmatmul.bf16.gmra.mxu0 %v1603
        %v1640 = vpop.f32.mrf.mxu0
        %v1641 = vadd.f32 0.0, %v1640
        %v1642 = vpop.f32.mrf.mxu0
        %v1643 = vadd.f32 0.0, %v1642
        %1644 = vmatmul.bf16.gmra.mxu0 %v1606
        %v1645 = vpop.f32.mrf.mxu0
        %v1646 = vadd.f32 0.0, %v1645
        %v1647 = vpop.f32.mrf.mxu0
        %v1648 = vadd.f32 0.0, %v1647
        %1649 = vmatmul.bf16.gmra.mxu0 %v1609
        %v1650 = vpop.f32.mrf.mxu0
        %v1651 = vadd.f32 0.0, %v1650
        %v1652 = vpop.f32.mrf.mxu0
        %v1653 = vadd.f32 0.0, %v1652
        %1654 = vmatmul.bf16.gmra.mxu0 %v1612
        %v1655 = vpop.f32.mrf.mxu0
        %v1656 = vadd.f32 0.0, %v1655
        %v1657 = vpop.f32.mrf.mxu0
        %v1658 = vadd.f32 0.0, %v1657
        %1659 = vmatmul.bf16.gmra.mxu0 %v1615
        %v1660 = vpop.f32.mrf.mxu0
        %v1661 = vadd.f32 0.0, %v1660
        %v1662 = vpop.f32.mrf.mxu0
        %v1663 = vadd.f32 0.0, %v1662
        %1664 = vmatmul.bf16.gmra.mxu0 %v1618
        %v1665 = vpop.f32.mrf.mxu0
        %v1666 = vadd.f32 0.0, %v1665
        %v1667 = vpop.f32.mrf.mxu0
        %v1668 = vadd.f32 0.0, %v1667
        %1669 = vmatmul.bf16.gmra.mxu0 %v1621
        %v1670 = vpop.f32.mrf.mxu0
        %v1671 = vadd.f32 0.0, %v1670
        %v1672 = vpop.f32.mrf.mxu0
        %v1673 = vadd.f32 0.0, %v1672
        %1674 = vdwg.mxu0
        %v1675 = vadd.f32 %v1521, %v1636
        %v1676 = vadd.f32 %v1522, %v1638
        %v1677 = vadd.f32 %v1523, %v1641
        %v1678 = vadd.f32 %v1524, %v1643
        %v1679 = vadd.f32 %v1525, %v1646
        %v1680 = vadd.f32 %v1526, %v1648
        %v1681 = vadd.f32 %v1527, %v1651
        %v1682 = vadd.f32 %v1528, %v1653
        %v1683 = vadd.f32 %v1529, %v1656
        %v1684 = vadd.f32 %v1530, %v1658
        %v1685 = vadd.f32 %v1531, %v1661
        %v1686 = vadd.f32 %v1532, %v1663
        %v1687 = vadd.f32 %v1533, %v1666
        %v1688 = vadd.f32 %v1534, %v1668
        %v1689 = vadd.f32 %v1535, %v1671
        %v1690 = vadd.f32 %v1536, %v1673
        %v1691 = vld [vmem:[%s1540] sm:$0xf]
        %v1692 = vld [vmem:[%s1540 + $0x4] sm:$0xf]
        %v1693 = vld [vmem:[%s1540 + $0x8] sm:$0x1]
        %v1694 = vld [vmem:[%s1540 + $0xc] sm:$0xf]
        %v1695 = vld [vmem:[%s1540 + $0x10] sm:$0xf]
        %v1696 = vld [vmem:[%s1540 + $0x14] sm:$0x1]
        %v1697 = vld [vmem:[%s1540 + $0x18] sm:$0xf]
        %v1698 = vld [vmem:[%s1540 + $0x1c] sm:$0xf]
        %v1699 = vld [vmem:[%s1540 + $0x20] sm:$0x1]
        %v1700 = vld [vmem:[%s1540 + $0x24] sm:$0xf]
        %v1701 = vld [vmem:[%s1540 + $0x28] sm:$0xf]
        %v1702 = vld [vmem:[%s1540 + $0x2c] sm:$0x1]
        %v1703 = vld [vmem:[%s1540 + $0x30] sm:$0xf]
        %v1704 = vld [vmem:[%s1540 + $0x34] sm:$0xf]
        %v1705 = vld [vmem:[%s1540 + $0x38] sm:$0x1]
        %v1706 = vld [vmem:[%s1540 + $0x3c] sm:$0xf]
        %v1707 = vld [vmem:[%s1540 + $0x40] sm:$0xf]
        %v1708 = vld [vmem:[%s1540 + $0x44] sm:$0x1]
        %v1709 = vld [vmem:[%s1540 + $0x48] sm:$0xf]
        %v1710 = vld [vmem:[%s1540 + $0x4c] sm:$0xf]
        %v1711 = vld [vmem:[%s1540 + $0x50] sm:$0x1]
        %v1712 = vld [vmem:[%s1540 + $0x54] sm:$0xf]
        %v1713 = vld [vmem:[%s1540 + $0x58] sm:$0xf]
        %v1714 = vld [vmem:[%s1540 + $0x5c] sm:$0x1]
        %v1716 = vshrl.u32 %v1691, 16
        %v1718 = vrot.slane %v1716, 4
        %v1719 = vshll.u32 %v1691, 16
        %v1721 = vrot.slane %v1719, 5
        %v1722 = vor.u32 %v1718, %v1721
        %v1723 = vrot.slane %v1722, 4
        %v1725 = vshll.u32 %v1692, 16
        %v1727 = vrot.slane %v1725, 5
        %v1728 = vsel %vm229, %v1723, %v1727
        %v1729 = vshrl.u32 %v1692, 16
        %v1731 = vrot.slane %v1729, 4
        %v1732 = vor.u32 %v1731, %v1727
        %v1733 = vrot.slane %v1732, 4
        %v1735 = vshll.u32 %v1693, 16
        %v1737 = vrot.slane %v1735, 5
        %v1738 = vsel %vm229, %v1733, %v1737
        %v1740 = vshrl.u32 %v1694, 16
        %v1742 = vrot.slane %v1740, 4
        %v1743 = vshll.u32 %v1694, 16
        %v1745 = vrot.slane %v1743, 5
        %v1746 = vor.u32 %v1742, %v1745
        %v1747 = vrot.slane %v1746, 4
        %v1749 = vshll.u32 %v1695, 16
        %v1751 = vrot.slane %v1749, 5
        %v1752 = vsel %vm229, %v1747, %v1751
        %v1753 = vshrl.u32 %v1695, 16
        %v1755 = vrot.slane %v1753, 4
        %v1756 = vor.u32 %v1755, %v1751
        %v1757 = vrot.slane %v1756, 4
        %v1759 = vshll.u32 %v1696, 16
        %v1761 = vrot.slane %v1759, 5
        %v1762 = vsel %vm229, %v1757, %v1761
        %v1764 = vshrl.u32 %v1697, 16
        %v1766 = vrot.slane %v1764, 4
        %v1767 = vshll.u32 %v1697, 16
        %v1769 = vrot.slane %v1767, 5
        %v1770 = vor.u32 %v1766, %v1769
        %v1771 = vrot.slane %v1770, 4
        %v1773 = vshll.u32 %v1698, 16
        %v1775 = vrot.slane %v1773, 5
        %v1776 = vsel %vm229, %v1771, %v1775
        %v1777 = vshrl.u32 %v1698, 16
        %v1779 = vrot.slane %v1777, 4
        %v1780 = vor.u32 %v1779, %v1775
        %v1781 = vrot.slane %v1780, 4
        %v1783 = vshll.u32 %v1699, 16
        %v1785 = vrot.slane %v1783, 5
        %v1786 = vsel %vm229, %v1781, %v1785
        %v1788 = vshrl.u32 %v1700, 16
        %v1790 = vrot.slane %v1788, 4
        %v1791 = vshll.u32 %v1700, 16
        %v1793 = vrot.slane %v1791, 5
        %v1794 = vor.u32 %v1790, %v1793
        %v1795 = vrot.slane %v1794, 4
        %v1797 = vshll.u32 %v1701, 16
        %v1799 = vrot.slane %v1797, 5
        %v1800 = vsel %vm229, %v1795, %v1799
        %v1801 = vshrl.u32 %v1701, 16
        %v1803 = vrot.slane %v1801, 4
        %v1804 = vor.u32 %v1803, %v1799
        %v1805 = vrot.slane %v1804, 4
        %v1807 = vshll.u32 %v1702, 16
        %v1809 = vrot.slane %v1807, 5
        %v1810 = vsel %vm229, %v1805, %v1809
        %v1812 = vshrl.u32 %v1703, 16
        %v1814 = vrot.slane %v1812, 4
        %v1815 = vshll.u32 %v1703, 16
        %v1817 = vrot.slane %v1815, 5
        %v1818 = vor.u32 %v1814, %v1817
        %v1819 = vrot.slane %v1818, 4
        %v1821 = vshll.u32 %v1704, 16
        %v1823 = vrot.slane %v1821, 5
        %v1824 = vsel %vm229, %v1819, %v1823
        %v1825 = vshrl.u32 %v1704, 16
        %v1827 = vrot.slane %v1825, 4
        %v1828 = vor.u32 %v1827, %v1823
        %v1829 = vrot.slane %v1828, 4
        %v1831 = vshll.u32 %v1705, 16
        %v1833 = vrot.slane %v1831, 5
        %v1834 = vsel %vm229, %v1829, %v1833
        %v1836 = vshrl.u32 %v1706, 16
        %v1838 = vrot.slane %v1836, 4
        %v1839 = vshll.u32 %v1706, 16
        %v1841 = vrot.slane %v1839, 5
        %v1842 = vor.u32 %v1838, %v1841
        %v1843 = vrot.slane %v1842, 4
        %v1845 = vshll.u32 %v1707, 16
        %v1847 = vrot.slane %v1845, 5
        %v1848 = vsel %vm229, %v1843, %v1847
        %v1849 = vshrl.u32 %v1707, 16
        %v1851 = vrot.slane %v1849, 4
        %v1852 = vor.u32 %v1851, %v1847
        %v1853 = vrot.slane %v1852, 4
        %v1855 = vshll.u32 %v1708, 16
        %v1857 = vrot.slane %v1855, 5
        %v1858 = vsel %vm229, %v1853, %v1857
        %v1860 = vshrl.u32 %v1709, 16
        %v1862 = vrot.slane %v1860, 4
        %v1863 = vshll.u32 %v1709, 16
        %v1865 = vrot.slane %v1863, 5
        %v1866 = vor.u32 %v1862, %v1865
        %v1867 = vrot.slane %v1866, 4
        %v1869 = vshll.u32 %v1710, 16
        %v1871 = vrot.slane %v1869, 5
        %v1872 = vsel %vm229, %v1867, %v1871
        %v1873 = vshrl.u32 %v1710, 16
        %v1875 = vrot.slane %v1873, 4
        %v1876 = vor.u32 %v1875, %v1871
        %v1877 = vrot.slane %v1876, 4
        %v1879 = vshll.u32 %v1711, 16
        %v1881 = vrot.slane %v1879, 5
        %v1882 = vsel %vm229, %v1877, %v1881
        %v1884 = vshrl.u32 %v1712, 16
        %v1886 = vrot.slane %v1884, 4
        %v1887 = vshll.u32 %v1712, 16
        %v1889 = vrot.slane %v1887, 5
        %v1890 = vor.u32 %v1886, %v1889
        %v1891 = vrot.slane %v1890, 4
        %v1893 = vshll.u32 %v1713, 16
        %v1895 = vrot.slane %v1893, 5
        %v1896 = vsel %vm229, %v1891, %v1895
        %v1897 = vshrl.u32 %v1713, 16
        %v1899 = vrot.slane %v1897, 4
        %v1900 = vor.u32 %v1899, %v1895
        %v1901 = vrot.slane %v1900, 4
        %v1903 = vshll.u32 %v1714, 16
        %v1905 = vrot.slane %v1903, 5
        %v1906 = vsel %vm229, %v1901, %v1905
        %s1907 = scalar_lea.vmem %s1, 14
        %v1908 = vld [vmem:[%s1907] sm:$0x3]
        %v1909 = vunpack.c.l.b16 %v1728
        %v1910 = vunpack.c.l.b16 %v1738
        %v1911 = vunpack.c.l.b16 %v1752
        %v1912 = vunpack.c.l.b16 %v1762
        %v1913 = vunpack.c.l.b16 %v1776
        %v1914 = vunpack.c.l.b16 %v1786
        %v1915 = vunpack.c.l.b16 %v1800
        %v1916 = vunpack.c.l.b16 %v1810
        %v1917 = vunpack.c.l.b16 %v1824
        %v1918 = vunpack.c.l.b16 %v1834
        %v1919 = vunpack.c.l.b16 %v1848
        %v1920 = vunpack.c.l.b16 %v1858
        %v1921 = vunpack.c.l.b16 %v1872
        %v1922 = vunpack.c.l.b16 %v1882
        %v1923 = vunpack.c.l.b16 %v1896
        %v1924 = vunpack.c.l.b16 %v1906
        %v1925 = vpack.c.b16 %v1910, %v1909
        %v1926 = vpack.c.b16 %v1912, %v1911
        %v1927 = vpack.c.b16 %v1914, %v1913
        %v1928 = vpack.c.b16 %v1916, %v1915
        %v1929 = vpack.c.b16 %v1918, %v1917
        %v1930 = vpack.c.b16 %v1920, %v1919
        %v1931 = vpack.c.b16 %v1922, %v1921
        %v1932 = vpack.c.b16 %v1924, %v1923
        %v1934 = vsel %vm448, %v1925, 0
        %v1937 = vsel %vm448, %v1926, 0
        %v1940 = vsel %vm448, %v1927, 0
        %v1943 = vsel %vm448, %v1928, 0
        %v1946 = vsel %vm448, %v1929, 0
        %v1949 = vsel %vm448, %v1930, 0
        %v1952 = vsel %vm448, %v1931, 0
        %v1955 = vsel %vm448, %v1932, 0
        %v1958 = vsel %vm473, %v1908, 0
        %1960 = vmatpush.bf16.msra.mxu0 0
        %1961 = vmatpush.bf16.msra.mxu0 0
        %1962 = vmatpush.bf16.msra.mxu0 0
        %1963 = vmatpush.bf16.msra.mxu0 0
        %1964 = vmatpush.bf16.msra.mxu0 0
        %1965 = vmatpush.bf16.msra.mxu0 0
        %1966 = vmatpush.bf16.msra.mxu0 0
        %1967 = vmatpush.bf16.msra.mxu0 %v1958
        %1968 = vmatmul.bf16.gmra.mxu0 %v1934
        %v1969 = vpop.f32.mrf.mxu0
        %v1970 = vadd.f32 0.0, %v1969
        %v1971 = vpop.f32.mrf.mxu0
        %v1972 = vadd.f32 0.0, %v1971
        %1973 = vmatmul.bf16.gmra.mxu0 %v1937
        %v1974 = vpop.f32.mrf.mxu0
        %v1975 = vadd.f32 0.0, %v1974
        %v1976 = vpop.f32.mrf.mxu0
        %v1977 = vadd.f32 0.0, %v1976
        %1978 = vmatmul.bf16.gmra.mxu0 %v1940
        %v1979 = vpop.f32.mrf.mxu0
        %v1980 = vadd.f32 0.0, %v1979
        %v1981 = vpop.f32.mrf.mxu0
        %v1982 = vadd.f32 0.0, %v1981
        %1983 = vmatmul.bf16.gmra.mxu0 %v1943
        %v1984 = vpop.f32.mrf.mxu0
        %v1985 = vadd.f32 0.0, %v1984
        %v1986 = vpop.f32.mrf.mxu0
        %v1987 = vadd.f32 0.0, %v1986
        %1988 = vmatmul.bf16.gmra.mxu0 %v1946
        %v1989 = vpop.f32.mrf.mxu0
        %v1990 = vadd.f32 0.0, %v1989
        %v1991 = vpop.f32.mrf.mxu0
        %v1992 = vadd.f32 0.0, %v1991
        %1993 = vmatmul.bf16.gmra.mxu0 %v1949
        %v1994 = vpop.f32.mrf.mxu0
        %v1995 = vadd.f32 0.0, %v1994
        %v1996 = vpop.f32.mrf.mxu0
        %v1997 = vadd.f32 0.0, %v1996
        %1998 = vmatmul.bf16.gmra.mxu0 %v1952
        %v1999 = vpop.f32.mrf.mxu0
        %v2000 = vadd.f32 0.0, %v1999
        %v2001 = vpop.f32.mrf.mxu0
        %v2002 = vadd.f32 0.0, %v2001
        %2003 = vmatmul.bf16.gmra.mxu0 %v1955
        %v2004 = vpop.f32.mrf.mxu0
        %v2005 = vadd.f32 0.0, %v2004
        %v2006 = vpop.f32.mrf.mxu0
        %v2007 = vadd.f32 0.0, %v2006
        %2008 = vdwg.mxu0
        %v2009 = vadd.f32 %v1675, %v1970
        %v2010 = vadd.f32 %v1676, %v1972
        %v2011 = vadd.f32 %v1677, %v1975
        %v2012 = vadd.f32 %v1678, %v1977
        %v2013 = vadd.f32 %v1679, %v1980
        %v2014 = vadd.f32 %v1680, %v1982
        %v2015 = vadd.f32 %v1681, %v1985
        %v2016 = vadd.f32 %v1682, %v1987
        %v2017 = vadd.f32 %v1683, %v1990
        %v2018 = vadd.f32 %v1684, %v1992
        %v2019 = vadd.f32 %v1685, %v1995
        %v2020 = vadd.f32 %v1686, %v1997
        %v2021 = vadd.f32 %v1687, %v2000
        %v2022 = vadd.f32 %v1688, %v2002
        %v2023 = vadd.f32 %v1689, %v2005
        %v2024 = vadd.f32 %v1690, %v2007
        %v2025 = vld [vmem:[%s1540] sm:$0xe]
        %v2026 = vld [vmem:[%s1540 + $0xc] sm:$0xe]
        %v2027 = vld [vmem:[%s1540 + $0x18] sm:$0xe]
        %v2028 = vld [vmem:[%s1540 + $0x24] sm:$0xe]
        %v2029 = vld [vmem:[%s1540 + $0x30] sm:$0xe]
        %v2030 = vld [vmem:[%s1540 + $0x3c] sm:$0xe]
        %v2031 = vld [vmem:[%s1540 + $0x48] sm:$0xe]
        %v2032 = vld [vmem:[%s1540 + $0x54] sm:$0xe]
        %v2057 = vrot.slane %v2025, 5
        %v2058 = vrot.slane %v2057, 4
        %v2059 = vrot.slane %v1692, 5
        %v2060 = vsel %vm668, %v2058, %v2059
        %v2061 = vrot.slane %v2059, 4
        %v2062 = vrot.slane %v1693, 5
        %v2063 = vsel %vm668, %v2061, %v2062
        %v2064 = vrot.slane %v2026, 5
        %v2065 = vrot.slane %v2064, 4
        %v2066 = vrot.slane %v1695, 5
        %v2067 = vsel %vm668, %v2065, %v2066
        %v2068 = vrot.slane %v2066, 4
        %v2069 = vrot.slane %v1696, 5
        %v2070 = vsel %vm668, %v2068, %v2069
        %v2071 = vrot.slane %v2027, 5
        %v2072 = vrot.slane %v2071, 4
        %v2073 = vrot.slane %v1698, 5
        %v2074 = vsel %vm668, %v2072, %v2073
        %v2075 = vrot.slane %v2073, 4
        %v2076 = vrot.slane %v1699, 5
        %v2077 = vsel %vm668, %v2075, %v2076
        %v2078 = vrot.slane %v2028, 5
        %v2079 = vrot.slane %v2078, 4
        %v2080 = vrot.slane %v1701, 5
        %v2081 = vsel %vm668, %v2079, %v2080
        %v2082 = vrot.slane %v2080, 4
        %v2083 = vrot.slane %v1702, 5
        %v2084 = vsel %vm668, %v2082, %v2083
        %v2085 = vrot.slane %v2029, 5
        %v2086 = vrot.slane %v2085, 4
        %v2087 = vrot.slane %v1704, 5
        %v2088 = vsel %vm668, %v2086, %v2087
        %v2089 = vrot.slane %v2087, 4
        %v2090 = vrot.slane %v1705, 5
        %v2091 = vsel %vm668, %v2089, %v2090
        %v2092 = vrot.slane %v2030, 5
        %v2093 = vrot.slane %v2092, 4
        %v2094 = vrot.slane %v1707, 5
        %v2095 = vsel %vm668, %v2093, %v2094
        %v2096 = vrot.slane %v2094, 4
        %v2097 = vrot.slane %v1708, 5
        %v2098 = vsel %vm668, %v2096, %v2097
        %v2099 = vrot.slane %v2031, 5
        %v2100 = vrot.slane %v2099, 4
        %v2101 = vrot.slane %v1710, 5
        %v2102 = vsel %vm668, %v2100, %v2101
        %v2103 = vrot.slane %v2101, 4
        %v2104 = vrot.slane %v1711, 5
        %v2105 = vsel %vm668, %v2103, %v2104
        %v2106 = vrot.slane %v2032, 5
        %v2107 = vrot.slane %v2106, 4
        %v2108 = vrot.slane %v1713, 5
        %v2109 = vsel %vm668, %v2107, %v2108
        %v2110 = vrot.slane %v2108, 4
        %v2111 = vrot.slane %v1714, 5
        %v2112 = vsel %vm668, %v2110, %v2111
        %s2113 = scalar_lea.vmem %s1, 16
        %v2114 = vld [vmem:[%s2113] sm:$0x3]
        %v2115 = vunpack.c.l.b16 %v2060
        %v2116 = vunpack.c.l.b16 %v2063
        %v2117 = vunpack.c.l.b16 %v2067
        %v2118 = vunpack.c.l.b16 %v2070
        %v2119 = vunpack.c.l.b16 %v2074
        %v2120 = vunpack.c.l.b16 %v2077
        %v2121 = vunpack.c.l.b16 %v2081
        %v2122 = vunpack.c.l.b16 %v2084
        %v2123 = vunpack.c.l.b16 %v2088
        %v2124 = vunpack.c.l.b16 %v2091
        %v2125 = vunpack.c.l.b16 %v2095
        %v2126 = vunpack.c.l.b16 %v2098
        %v2127 = vunpack.c.l.b16 %v2102
        %v2128 = vunpack.c.l.b16 %v2105
        %v2129 = vunpack.c.l.b16 %v2109
        %v2130 = vunpack.c.l.b16 %v2112
        %v2131 = vpack.c.b16 %v2116, %v2115
        %v2132 = vpack.c.b16 %v2118, %v2117
        %v2133 = vpack.c.b16 %v2120, %v2119
        %v2134 = vpack.c.b16 %v2122, %v2121
        %v2135 = vpack.c.b16 %v2124, %v2123
        %v2136 = vpack.c.b16 %v2126, %v2125
        %v2137 = vpack.c.b16 %v2128, %v2127
        %v2138 = vpack.c.b16 %v2130, %v2129
        %v2140 = vsel %vm448, %v2131, 0
        %v2143 = vsel %vm448, %v2132, 0
        %v2146 = vsel %vm448, %v2133, 0
        %v2149 = vsel %vm448, %v2134, 0
        %v2152 = vsel %vm448, %v2135, 0
        %v2155 = vsel %vm448, %v2136, 0
        %v2158 = vsel %vm448, %v2137, 0
        %v2161 = vsel %vm448, %v2138, 0
        %v2164 = vsel %vm473, %v2114, 0
        %2166 = vmatpush.bf16.msra.mxu0 0
        %2167 = vmatpush.bf16.msra.mxu0 0
        %2168 = vmatpush.bf16.msra.mxu0 0
        %2169 = vmatpush.bf16.msra.mxu0 0
        %2170 = vmatpush.bf16.msra.mxu0 0
        %2171 = vmatpush.bf16.msra.mxu0 0
        %2172 = vmatpush.bf16.msra.mxu0 0
        %2173 = vmatpush.bf16.msra.mxu0 %v2164
        %2174 = vmatmul.bf16.gmra.mxu0 %v2140
        %v2175 = vpop.f32.mrf.mxu0
        %v2176 = vadd.f32 0.0, %v2175
        %v2177 = vpop.f32.mrf.mxu0
        %v2178 = vadd.f32 0.0, %v2177
        %2179 = vmatmul.bf16.gmra.mxu0 %v2143
        %v2180 = vpop.f32.mrf.mxu0
        %v2181 = vadd.f32 0.0, %v2180
        %v2182 = vpop.f32.mrf.mxu0
        %v2183 = vadd.f32 0.0, %v2182
        %2184 = vmatmul.bf16.gmra.mxu0 %v2146
        %v2185 = vpop.f32.mrf.mxu0
        %v2186 = vadd.f32 0.0, %v2185
        %v2187 = vpop.f32.mrf.mxu0
        %v2188 = vadd.f32 0.0, %v2187
        %2189 = vmatmul.bf16.gmra.mxu0 %v2149
        %v2190 = vpop.f32.mrf.mxu0
        %v2191 = vadd.f32 0.0, %v2190
        %v2192 = vpop.f32.mrf.mxu0
        %v2193 = vadd.f32 0.0, %v2192
        %2194 = vmatmul.bf16.gmra.mxu0 %v2152
        %v2195 = vpop.f32.mrf.mxu0
        %v2196 = vadd.f32 0.0, %v2195
        %v2197 = vpop.f32.mrf.mxu0
        %v2198 = vadd.f32 0.0, %v2197
        %2199 = vmatmul.bf16.gmra.mxu0 %v2155
        %v2200 = vpop.f32.mrf.mxu0
        %v2201 = vadd.f32 0.0, %v2200
        %v2202 = vpop.f32.mrf.mxu0
        %v2203 = vadd.f32 0.0, %v2202
        %2204 = vmatmul.bf16.gmra.mxu0 %v2158
        %v2205 = vpop.f32.mrf.mxu0
        %v2206 = vadd.f32 0.0, %v2205
        %v2207 = vpop.f32.mrf.mxu0
        %v2208 = vadd.f32 0.0, %v2207
        %2209 = vmatmul.bf16.gmra.mxu0 %v2161
        %v2210 = vpop.f32.mrf.mxu0
        %v2211 = vadd.f32 0.0, %v2210
        %v2212 = vpop.f32.mrf.mxu0
        %v2213 = vadd.f32 0.0, %v2212
        %2214 = vdwg.mxu0
        %v2215 = vadd.f32 %v2009, %v2176
        %v2216 = vadd.f32 %v2010, %v2178
        %v2217 = vadd.f32 %v2011, %v2181
        %v2218 = vadd.f32 %v2012, %v2183
        %v2219 = vadd.f32 %v2013, %v2186
        %v2220 = vadd.f32 %v2014, %v2188
        %v2221 = vadd.f32 %v2015, %v2191
        %v2222 = vadd.f32 %v2016, %v2193
        %v2223 = vadd.f32 %v2017, %v2196
        %v2224 = vadd.f32 %v2018, %v2198
        %v2225 = vadd.f32 %v2019, %v2201
        %v2226 = vadd.f32 %v2020, %v2203
        %v2227 = vadd.f32 %v2021, %v2206
        %v2228 = vadd.f32 %v2022, %v2208
        %v2229 = vadd.f32 %v2023, %v2211
        %v2230 = vadd.f32 %v2024, %v2213
        %v2231 = vpack.c.bf16 %v2215, %v2215
        %v2232 = vpack.c.bf16 %v2216, %v2216
        %v2233 = vpack.c.bf16 %v2217, %v2217
        %v2234 = vpack.c.bf16 %v2218, %v2218
        %v2235 = vpack.c.bf16 %v2219, %v2219
        %v2236 = vpack.c.bf16 %v2220, %v2220
        %v2237 = vpack.c.bf16 %v2221, %v2221
        %v2238 = vpack.c.bf16 %v2222, %v2222
        %v2239 = vpack.c.bf16 %v2223, %v2223
        %v2240 = vpack.c.bf16 %v2224, %v2224
        %v2241 = vpack.c.bf16 %v2225, %v2225
        %v2242 = vpack.c.bf16 %v2226, %v2226
        %v2243 = vpack.c.bf16 %v2227, %v2227
        %v2244 = vpack.c.bf16 %v2228, %v2228
        %v2245 = vpack.c.bf16 %v2229, %v2229
        %v2246 = vpack.c.bf16 %v2230, %v2230
        %2247 = vst [vmem:[%s183] sm:$0xf] %v2231
        %2248 = vst [vmem:[%s183 + $0x4] sm:$0xf] %v2232
        %2249 = vst [vmem:[%s183 + $0x8] sm:$0xf] %v2233
        %2250 = vst [vmem:[%s183 + $0xc] sm:$0xf] %v2234
        %2251 = vst [vmem:[%s183 + $0x10] sm:$0xf] %v2235
        %2252 = vst [vmem:[%s183 + $0x14] sm:$0xf] %v2236
        %2253 = vst [vmem:[%s183 + $0x18] sm:$0xf] %v2237
        %2254 = vst [vmem:[%s183 + $0x1c] sm:$0xf] %v2238
        %2255 = vst [vmem:[%s183 + $0x20] sm:$0xf] %v2239
        %2256 = vst [vmem:[%s183 + $0x24] sm:$0xf] %v2240
        %2257 = vst [vmem:[%s183 + $0x28] sm:$0xf] %v2241
        %2258 = vst [vmem:[%s183 + $0x2c] sm:$0xf] %v2242
        %2259 = vst [vmem:[%s183 + $0x30] sm:$0xf] %v2243
        %2260 = vst [vmem:[%s183 + $0x34] sm:$0xf] %v2244
        %2261 = vst [vmem:[%s183 + $0x38] sm:$0xf] %v2245
        %2262 = vst [vmem:[%s183 + $0x3c] sm:$0xf] %v2246
        %v2263 = vadd.f32 %v2215, %v2216
        %v2264 = vadd.f32 %v2263, %v2217
        %v2265 = vadd.f32 %v2264, %v2218
        %v2266 = vadd.f32 %v2265, %v2219
        %v2267 = vadd.f32 %v2266, %v2220
        %v2268 = vadd.f32 %v2267, %v2221
        %v2269 = vadd.f32 %v2268, %v2222
        %v2270 = vadd.f32 %v2269, %v2223
        %v2271 = vadd.f32 %v2270, %v2224
        %v2272 = vadd.f32 %v2271, %v2225
        %v2273 = vadd.f32 %v2272, %v2226
        %v2274 = vadd.f32 %v2273, %v2227
        %v2275 = vadd.f32 %v2274, %v2228
        %v2276 = vadd.f32 %v2275, %v2229
        %v2277 = vadd.f32 %v2276, %v2230
        %v2278 = vrot.slane %v2277, 4
        %v2279 = vadd.f32 %v2277, %v2278
        %v2280 = vrot.slane %v2279, 2
        %v2281 = vadd.f32 %v2279, %v2280
        %v2282 = vrot.slane %v2281, 1
        %v2283 = vadd.f32 %v2281, %v2282
        %v2284 = vmul.f32 %v2283, 0.0078125
        %v2285 = vsub.f32 %v2215, %v2284
        %v2286 = vsub.f32 %v2216, %v2284
        %v2287 = vsub.f32 %v2217, %v2284
        %v2288 = vsub.f32 %v2218, %v2284
        %v2289 = vsub.f32 %v2219, %v2284
        %v2290 = vsub.f32 %v2220, %v2284
        %v2291 = vsub.f32 %v2221, %v2284
        %v2292 = vsub.f32 %v2222, %v2284
        %v2293 = vsub.f32 %v2223, %v2284
        %v2294 = vsub.f32 %v2224, %v2284
        %v2295 = vsub.f32 %v2225, %v2284
        %v2296 = vsub.f32 %v2226, %v2284
        %v2297 = vsub.f32 %v2227, %v2284
        %v2298 = vsub.f32 %v2228, %v2284
        %v2299 = vsub.f32 %v2229, %v2284
        %v2300 = vsub.f32 %v2230, %v2284
        %v2301 = vmul.f32 %v2285, %v2285
        %v2302 = vmul.f32 %v2286, %v2286
        %v2303 = vmul.f32 %v2287, %v2287
        %v2304 = vmul.f32 %v2288, %v2288
        %v2305 = vmul.f32 %v2289, %v2289
        %v2306 = vmul.f32 %v2290, %v2290
        %v2307 = vmul.f32 %v2291, %v2291
        %v2308 = vmul.f32 %v2292, %v2292
        %v2309 = vmul.f32 %v2293, %v2293
        %v2310 = vmul.f32 %v2294, %v2294
        %v2311 = vmul.f32 %v2295, %v2295
        %v2312 = vmul.f32 %v2296, %v2296
        %v2313 = vmul.f32 %v2297, %v2297
        %v2314 = vmul.f32 %v2298, %v2298
        %v2315 = vmul.f32 %v2299, %v2299
        %v2316 = vmul.f32 %v2300, %v2300
        %v2317 = vadd.f32 %v2301, %v2302
        %v2318 = vadd.f32 %v2317, %v2303
        %v2319 = vadd.f32 %v2318, %v2304
        %v2320 = vadd.f32 %v2319, %v2305
        %v2321 = vadd.f32 %v2320, %v2306
        %v2322 = vadd.f32 %v2321, %v2307
        %v2323 = vadd.f32 %v2322, %v2308
        %v2324 = vadd.f32 %v2323, %v2309
        %v2325 = vadd.f32 %v2324, %v2310
        %v2326 = vadd.f32 %v2325, %v2311
        %v2327 = vadd.f32 %v2326, %v2312
        %v2328 = vadd.f32 %v2327, %v2313
        %v2329 = vadd.f32 %v2328, %v2314
        %v2330 = vadd.f32 %v2329, %v2315
        %v2331 = vadd.f32 %v2330, %v2316
        %v2332 = vrot.slane %v2331, 4
        %v2333 = vadd.f32 %v2331, %v2332
        %v2334 = vrot.slane %v2333, 2
        %v2335 = vadd.f32 %v2333, %v2334
        %v2336 = vrot.slane %v2335, 1
        %v2337 = vadd.f32 %v2335, %v2336
        %vm2338 = vcmask 1040384
        %v2339 = vsel %vm2338, %v2284, %v2337
        %2340 = vst [vmem:[%s190] sm:$0x3] %v2339
        %s2341 = sand.u32 %s90, 1
        %s2342 = scalar_lea.sflag [#allocation3], %s2341
        %s2343 = sand.u32 %s90, 1
        %s2344 = smul.addr %s2343, 64
        %s2345 = scalar_lea.vmem [#allocation2], %s2344
        %s2346 = sand.u32 %s118, 1
        %s2347 = scalar_lea.sflag [#allocation5], %s2346
        %s2348 = sand.u32 %s118, 1
        %s2349 = smul.addr %s2348, 2
        %s2350 = scalar_lea.vmem [#allocation4], %s2349
        // Predicated region
        $region29: #{tpu_custom_call.1} parent=27 // pred_check
          %p2351 = pneg %p100
        $region30: #{tpu_custom_call.1} parent=27 // pred_check_branch
          %2353 = sbr.rel (%p2351) target = $region32
        $region31: #{tpu_custom_call.1} parent=27 // pred_region
          %s2354 = smul.u32 16, %s26
          %2356 = vsyncadd %s2342, 0
          %s2357 = smul.addr %s25, 32
          %s2358 = sadd.s32 %s2354, %s2357
          %s2359 = smul.addr %s2358, 4
          %s2360 = scalar_lea.hbm %s2, %s2359
          %s2361 = sshll.u32 %s2345, 4
          %s2362 = int_to_ptr.vmem [resolvable:$true] %s2361
          %s2363 = sshll.u32 %s2360, 4
          %s2364 = int_to_ptr.hbm [resolvable:$true] %s2363
          %2369 = dma.vmem_to_hbm [thread:$0]  %s2362, 1024, %s2364, %s2342, 64, 64, 4
        $region32: #{tpu_custom_call.1} parent=27 // pred_fallthru
          _
        // Predicated region
        $region33: #{tpu_custom_call.1} parent=27 // pred_check
          %p2370 = pneg %p128
        $region34: #{tpu_custom_call.1} parent=27 // pred_check_branch
          %2372 = sbr.rel (%p2370) target = $region36
        $region35: #{tpu_custom_call.1} parent=27 // pred_region
          %2374 = vsyncadd %s2347, 0
          %s2375 = smul.addr %s25, 2
          %s2376 = sadd.s32 %s26, %s2375
          %s2377 = smul.addr %s2376, 2
          %s2378 = scalar_lea.hbm %s3, %s2377
          %s2380 = sshll.u32 %s2350, 4
          %s2381 = int_to_ptr.vmem [resolvable:$true] %s2380
          %s2382 = sshll.u32 %s2378, 4
          %s2383 = int_to_ptr.hbm [resolvable:$true] %s2382
          %2385 = dma.vmem_to_hbm [thread:$0]  %s2381, 32, %s2383, %s2347
        $region36: #{tpu_custom_call.1} parent=27 // pred_fallthru
          _
      $region28: #{tpu_custom_call.1} parent=5 // pred_fallthru
        _
      %p2386 = scmp.le.s32.totalorder 2, %s16
      // Predicated region
      $region37: #{tpu_custom_call.1} parent=5 // pred_check
        %p2387 = pneg %p2386
      $region38: #{tpu_custom_call.1} parent=5 // pred_check_branch
        %2389 = sbr.rel (%p2387) target = $region40
      $region39: #{tpu_custom_call.1} parent=5 // pred_region
        %s2390 = ssub.s32 %s16, 2
        // Predicated region
        $region41: #{tpu_custom_call.1} parent=39 // pred_check
          %p2391 = pneg %p106
        $region42: #{tpu_custom_call.1} parent=39 // pred_check_branch
          %2393 = sbr.rel (%p2391) target = $region44
        $region43: #{tpu_custom_call.1} parent=39 // pred_region
          %s2394 = sand.u32 %s91, 1
          %s2395 = scalar_lea.sflag [#allocation3], %s2394
          %s2396 = sand.u32 %s91, 1
          %s2397 = smul.addr %s2396, 64
          %s2398 = scalar_lea.vmem [#allocation2], %s2397
          %2400 = dma.done %s2395, 1024
        $region44: #{tpu_custom_call.1} parent=39 // pred_fallthru
          _
        // Predicated region
        $region45: #{tpu_custom_call.1} parent=39 // pred_check
          %p2401 = pneg %p134
        $region46: #{tpu_custom_call.1} parent=39 // pred_check_branch
          %2403 = sbr.rel (%p2401) target = $region48
        $region47: #{tpu_custom_call.1} parent=39 // pred_region
          %s2404 = sand.u32 %s119, 1
          %s2405 = scalar_lea.sflag [#allocation5], %s2404
          %s2406 = sand.u32 %s119, 1
          %s2407 = smul.addr %s2406, 2
          %s2408 = scalar_lea.vmem [#allocation4], %s2407
          %2410 = dma.done %s2405, 32
        $region48: #{tpu_custom_call.1} parent=39 // pred_fallthru
          _
      $region40: #{tpu_custom_call.1} parent=5 // pred_fallthru
        _
    $region6: #{tpu_custom_call.1} parent=1 // loop_footer
      %s20 = sadd.s32 1, %s16
    $region7: #{tpu_custom_call.1} parent=1 // loop_footer_branch
      %15 = sbr.rel target = $region3
    $region8: #{tpu_custom_call.1} parent=1 // loop_exit
      _
    %2411 = vsyncpa [#allocation3], 1
    %s2412 = scalar_lea.sflag [#allocation3], 1
    %2413 = vsyncpa %s2412, 1
    %2414 = vsyncpa [#allocation5], 1
    %s2415 = scalar_lea.sflag [#allocation5], 1
    %2416 = vsyncpa %s2415, 1

</llo_original>
